<compile_context>
chip_gen: v7x
topology: tpu7x:2x2x1
jax: 0.10.0
libtpu: 0.0.40
codegen_flags: <defaults>
</compile_context>

<pallas_src>
import functools

import jax
import jax.numpy as jnp
import numpy as np
from jax.experimental import pallas as pl
from jax.experimental.pallas import tpu as pltpu


def _round_up(n, m):
    return (n + m - 1) // m * m


def _tpu_tile_defaults():
    """(batch-tile cap, vmem_limit_bytes) per TPU generation."""
    kind = ""
    try:
        kind = jax.devices()[0].device_kind.lower()
    except Exception:
        pass
    if "v7" in kind:
        # 64 MiB VMEM / TC, 2 TCs: strict budget -> weights (single-buffered,
        # bf16 ~4 MiB @512) + 2x x-tile + 2x out-tile + unrolled activations.
        return 512, 48 * 1024 * 1024
    if "v5" in kind or "v6" in kind:
        # 128 MiB VMEM parts: bigger tiles amortize the ~0.35 us/step overhead.
        return 1024, 96 * 1024 * 1024
    return 256, 32 * 1024 * 1024


def _mapping_kernel(x_ref, w_ref, b_ref, o_ref, *, num_layers, inv_nfeat, eps):
    """Fused PixelNorm + chain of WSLinear(+ReLU) layers.

      x_ref : (TB, D)  f32   noise tile (feature-padded, lane-dense)
      w_ref : (L, D, D) bf16 weights, pre-transposed, WS scale folded, 0-padded
      b_ref : (L, 1, D) f32  biases, 0-padded
      o_ref : (TB, D)        output tile (only the first w_dim lanes are real)
    """
    x = x_ref[...].astype(jnp.float32)
    # PixelNorm over the ORIGINAL feature count (padded lanes are exactly 0).
    ms = jnp.sum(x * x, axis=-1, keepdims=True) * inv_nfeat
    h = x * jax.lax.rsqrt(ms + eps)

    for l in range(num_layers):
        w = w_ref[l]                                   # (D, D) bf16
        b = b_ref[l]                                   # (1, D) f32
        # bf16 operands -> native MXU; f32 accumulate; f32 epilogue.
        h = jnp.dot(h.astype(jnp.bfloat16), w,
                    preferred_element_type=jnp.float32) + b
        if l < num_layers - 1:                         # ReLU between layers
            h = jnp.maximum(h, 0.0)

    o_ref[...] = h.astype(o_ref.dtype)


def fold_params(raw_params, gain=2.0, lane=128):
    """Prepare parameters OUTSIDE the hot path.

    raw_params: list of (weight (out_f, in_f), bias (out_f,), declared_in_features)
    returns   : (w_stack (L, D, D) bf16, b_stack (L, 1, D) f32, w_dim)
    with the WS scale folded in, weights transposed to (in,out), everything
    zero-padded to a common lane-dense width D = round_up(max dim, 128).
    """
    # Chain consistency.  The module's 3rd WSLinear is declared with z_dim
    # input features but consumes a hidden_dim-wide activation, so it only
    # works when z_dim == hidden_dim; assert that explicitly.
    widths = [raw_params[0][0].shape[1]]
    for w, _, _ in raw_params:
        out_f, in_f_actual = w.shape
        assert in_f_actual == widths[-1], (
            "MappingLayers requires z_dim == hidden_dim "
            "(3rd WSLinear is declared with in_features=z_dim)")
        widths.append(out_f)

    D = _round_up(max(widths), lane)
    ws, bs = [], []
    for w, b, declared_in_f in raw_params:
        scale = (gain / float(declared_in_f)) ** 0.5
        out_f, in_f = w.shape
        w_io = jnp.transpose(w).astype(jnp.float32) * scale      # (in, out)
        w_io = jnp.pad(w_io, ((0, D - in_f), (0, D - out_f)))
        ws.append(w_io.astype(jnp.bfloat16))
        bs.append(jnp.pad(b.astype(jnp.float32), (0, D - out_f)).reshape(1, D))
    return jnp.stack(ws), jnp.stack(bs), raw_params[-1][0].shape[0]


def mapping_layers_forward(noise, params, *, batch_tile=None, eps=1e-8):
    """Forward of MappingLayers. noise: (N, z_dim) -> (N, w_dim)."""
    w_stack, b_stack, out_dim = params
    N, Z = noise.shape
    L, D, _ = w_stack.shape

    # Lane-dense input: pad the feature axis to D (no-op at production widths).
    x = noise if Z == D else jnp.pad(noise, ((0, 0), (0, D - Z)))

    cap, vmem_limit = _tpu_tile_defaults()
    TB = batch_tile or max(8, min(cap, _round_up(N, 8)))
    grid = (pl.cdiv(N, TB),)          # ragged last tile handled by Pallas; no batch pad

    kernel = functools.partial(_mapping_kernel, num_layers=L,
                               inv_nfeat=1.0 / float(Z), eps=float(eps))

    def call(single_buffer_consts):
        # Weight/bias blocks are grid-invariant (index_map always (0,0,0)):
        # single-buffer them to free VMEM (important on v7x's 64 MiB).
        const_mode = ({"pipeline_mode": pl.Buffered(1)}
                      if single_buffer_consts else {})
        return pl.pallas_call(
            kernel,
            out_shape=jax.ShapeDtypeStruct((N, D), noise.dtype),
            grid_spec=pltpu.PrefetchScalarGridSpec(
                num_scalar_prefetch=0,
                grid=grid,
                in_specs=[
                    pl.BlockSpec((TB, D), lambda i: (i, 0)),
                    pl.BlockSpec((L, D, D), lambda i: (0, 0, 0), **const_mode),
                    pl.BlockSpec((L, 1, D), lambda i: (0, 0, 0), **const_mode),
                ],
                out_specs=pl.BlockSpec((TB, D), lambda i: (i, 0)),
            ),
            compiler_params=pltpu.CompilerParams(
                dimension_semantics=("parallel",),
                vmem_limit_bytes=vmem_limit,
            ),
        )(x, w_stack, b_stack)

    try:
        out = call(True)
    except Exception:           # jax version without single-buffer support
        out = call(False)
    return out if out_dim == D else out[:, :out_dim]


def _reference(noise, raw_params, gain=2.0, eps=1e-8):
    """Pure-JAX reference mirroring the PyTorch module, with the same bf16
    MXU-operand / f32-accumulate numerics as the kernel."""
    ms = jnp.sum(noise * noise, axis=1, keepdims=True) / noise.shape[1]
    x = noise * jax.lax.rsqrt(ms + eps)
    L = len(raw_params)
    for idx, (w, b, in_f) in enumerate(raw_params):
        scale = (gain / float(in_f)) ** 0.5
        w_io = (jnp.transpose(w) * scale).astype(jnp.bfloat16)
        x = jnp.dot(x.astype(jnp.bfloat16), w_io,
                    preferred_element_type=jnp.float32) + b
        if idx < L - 1:
            x = jnp.maximum(x, 0.0)
    return x


if __name__ == "__main__":
    # NOTE: the 3rd WSLinear in the PyTorch module is declared with z_dim input
    # features but consumes a hidden_dim-wide activation, so the module only
    # runs when z_dim == hidden_dim; we replicate that constraint here.
    Z_DIM = HIDDEN_DIM = 32
    W_DIM = 32
    N = 8

    layer_dims = [
        (Z_DIM, HIDDEN_DIM),
        (HIDDEN_DIM, HIDDEN_DIM),
        (Z_DIM, HIDDEN_DIM),       # declared in_features = z_dim, as in the module
        (HIDDEN_DIM, HIDDEN_DIM),
        (HIDDEN_DIM, HIDDEN_DIM),
        (HIDDEN_DIM, HIDDEN_DIM),
        (HIDDEN_DIM, HIDDEN_DIM),
        (HIDDEN_DIM, W_DIM),
    ]

    key = jax.random.PRNGKey(0)
    keys = jax.random.split(key, len(layer_dims) + 1)
    noise = jax.random.normal(keys[0], (N, Z_DIM), dtype=jnp.float32)

    # nn.init.normal_(weight), nn.init.zeros_(bias) -- deterministic synthetic init
    raw_params = []
    for k, (in_f, out_f) in zip(keys[1:], layer_dims):
        w = jax.random.normal(k, (out_f, in_f), dtype=jnp.float32)
        b = jnp.zeros((out_f,), dtype=jnp.float32)
        raw_params.append((w, b, in_f))

    params = fold_params(raw_params)

    out = jax.block_until_ready(mapping_layers_forward(noise, params))

    ref = _reference(noise, raw_params)
    np.testing.assert_allclose(np.asarray(out), np.asarray(ref),
                               rtol=2e-2, atol=2e-2)
    print("KERNEL_OK")
</pallas_src>

<mosaic_0001>
module attributes {stable_mosaic.version = 11 : i64} {
  func.func @_mapping_kernel(%arg0: i32, %arg1: memref<8x128xf32, #tpu.memory_space<vmem>>, %arg2: memref<8x128x128xbf16, #tpu.memory_space<vmem>>, %arg3: memref<8x1x128xf32, #tpu.memory_space<vmem>>, %arg4: memref<8x128xf32, #tpu.memory_space<vmem>>) attributes {dimension_semantics = [#tpu.dimension_semantics<parallel>], iteration_bounds = array<i64: 1>, scalar_prefetch = 0 : i64, scratch_operands = 0 : i64, tpu.core_type = #tpu.core_type<tc>, window_params = [{transform_indices = @transform_0, window_bounds = array<i64: 8, 128>}, {pipeline_mode = #tpu.pipeline_mode<synchronous>, transform_indices = @transform_1, window_bounds = array<i64: 8, 128, 128>}, {pipeline_mode = #tpu.pipeline_mode<synchronous>, transform_indices = @transform_2, window_bounds = array<i64: 8, 1, 128>}, {transform_indices = @transform_3, window_bounds = array<i64: 8, 128>}]} {
    %c0 = arith.constant 0 : index
    %c0_0 = arith.constant 0 : index
    %0 = vector.load %arg1[%c0, %c0_0] : memref<8x128xf32, #tpu.memory_space<vmem>>, vector<8x128xf32>
    %1 = arith.mulf %0, %0 : vector<8x128xf32>
    %cst = arith.constant dense<0.000000e+00> : vector<8xf32>
    %2 = vector.multi_reduction <add>, %1, %cst [1] : vector<8x128xf32> to vector<8xf32>
    %3 = vector.shape_cast %2 : vector<8xf32> to vector<8x1xf32>
    %cst_1 = arith.constant 3.125000e-02 : f32
    %4 = vector.broadcast %cst_1 : f32 to vector<8x1xf32>
    %5 = arith.mulf %3, %4 : vector<8x1xf32>
    %cst_2 = arith.constant 9.99999993E-9 : f32
    %6 = vector.broadcast %cst_2 : f32 to vector<8x1xf32>
    %7 = arith.addf %5, %6 : vector<8x1xf32>
    %8 = math.rsqrt %7 : vector<8x1xf32>
    %9 = vector.broadcast %8 : vector<8x1xf32> to vector<8x128xf32>
    %10 = arith.mulf %0, %9 : vector<8x128xf32>
    %c0_3 = arith.constant 0 : index
    %c0_4 = arith.constant 0 : index
    %c0_5 = arith.constant 0 : index
    %11 = vector.load %arg2[%c0_3, %c0_4, %c0_5] : memref<8x128x128xbf16, #tpu.memory_space<vmem>>, vector<1x128x128xbf16>
    %12 = vector.shape_cast %11 : vector<1x128x128xbf16> to vector<128x128xbf16>
    %c0_6 = arith.constant 0 : index
    %c0_7 = arith.constant 0 : index
    %c0_8 = arith.constant 0 : index
    %13 = vector.load %arg3[%c0_6, %c0_7, %c0_8] : memref<8x1x128xf32, #tpu.memory_space<vmem>>, vector<1x1x128xf32>
    %14 = vector.shape_cast %13 : vector<1x1x128xf32> to vector<1x128xf32>
    %15 = arith.truncf %10 : vector<8x128xf32> to vector<8x128xbf16>
    %cst_9 = arith.constant dense<0.000000e+00> : vector<8x128xf32>
    %16 = tpu.matmul %15, %12, %cst_9 {dimension_numbers = #tpu.dot_dimension_numbers<[1], [0], [0], [1], [0, 0, 1, 1], [], []>} : vector<8x128xbf16>, vector<128x128xbf16>, vector<8x128xf32> -> vector<8x128xf32>
    %17 = vector.broadcast %14 : vector<1x128xf32> to vector<8x128xf32>
    %18 = arith.addf %16, %17 : vector<8x128xf32>
    %cst_10 = arith.constant 0.000000e+00 : f32
    %19 = vector.broadcast %cst_10 : f32 to vector<8x128xf32>
    %20 = arith.maximumf %18, %19 : vector<8x128xf32>
    %c1 = arith.constant 1 : index
    %c0_11 = arith.constant 0 : index
    %c0_12 = arith.constant 0 : index
    %21 = vector.load %arg2[%c1, %c0_11, %c0_12] : memref<8x128x128xbf16, #tpu.memory_space<vmem>>, vector<1x128x128xbf16>
    %22 = vector.shape_cast %21 : vector<1x128x128xbf16> to vector<128x128xbf16>
    %c1_13 = arith.constant 1 : index
    %c0_14 = arith.constant 0 : index
    %c0_15 = arith.constant 0 : index
    %23 = vector.load %arg3[%c1_13, %c0_14, %c0_15] : memref<8x1x128xf32, #tpu.memory_space<vmem>>, vector<1x1x128xf32>
    %24 = vector.shape_cast %23 : vector<1x1x128xf32> to vector<1x128xf32>
    %25 = arith.truncf %20 : vector<8x128xf32> to vector<8x128xbf16>
    %cst_16 = arith.constant dense<0.000000e+00> : vector<8x128xf32>
    %26 = tpu.matmul %25, %22, %cst_16 {dimension_numbers = #tpu.dot_dimension_numbers<[1], [0], [0], [1], [0, 0, 1, 1], [], []>} : vector<8x128xbf16>, vector<128x128xbf16>, vector<8x128xf32> -> vector<8x128xf32>
    %27 = vector.broadcast %24 : vector<1x128xf32> to vector<8x128xf32>
    %28 = arith.addf %26, %27 : vector<8x128xf32>
    %cst_17 = arith.constant 0.000000e+00 : f32
    %29 = vector.broadcast %cst_17 : f32 to vector<8x128xf32>
    %30 = arith.maximumf %28, %29 : vector<8x128xf32>
    %c2 = arith.constant 2 : index
    %c0_18 = arith.constant 0 : index
    %c0_19 = arith.constant 0 : index
    %31 = vector.load %arg2[%c2, %c0_18, %c0_19] : memref<8x128x128xbf16, #tpu.memory_space<vmem>>, vector<1x128x128xbf16>
    %32 = vector.shape_cast %31 : vector<1x128x128xbf16> to vector<128x128xbf16>
    %c2_20 = arith.constant 2 : index
    %c0_21 = arith.constant 0 : index
    %c0_22 = arith.constant 0 : index
    %33 = vector.load %arg3[%c2_20, %c0_21, %c0_22] : memref<8x1x128xf32, #tpu.memory_space<vmem>>, vector<1x1x128xf32>
    %34 = vector.shape_cast %33 : vector<1x1x128xf32> to vector<1x128xf32>
    %35 = arith.truncf %30 : vector<8x128xf32> to vector<8x128xbf16>
    %cst_23 = arith.constant dense<0.000000e+00> : vector<8x128xf32>
    %36 = tpu.matmul %35, %32, %cst_23 {dimension_numbers = #tpu.dot_dimension_numbers<[1], [0], [0], [1], [0, 0, 1, 1], [], []>} : vector<8x128xbf16>, vector<128x128xbf16>, vector<8x128xf32> -> vector<8x128xf32>
    %37 = vector.broadcast %34 : vector<1x128xf32> to vector<8x128xf32>
    %38 = arith.addf %36, %37 : vector<8x128xf32>
    %cst_24 = arith.constant 0.000000e+00 : f32
    %39 = vector.broadcast %cst_24 : f32 to vector<8x128xf32>
    %40 = arith.maximumf %38, %39 : vector<8x128xf32>
    %c3 = arith.constant 3 : index
    %c0_25 = arith.constant 0 : index
    %c0_26 = arith.constant 0 : index
    %41 = vector.load %arg2[%c3, %c0_25, %c0_26] : memref<8x128x128xbf16, #tpu.memory_space<vmem>>, vector<1x128x128xbf16>
    %42 = vector.shape_cast %41 : vector<1x128x128xbf16> to vector<128x128xbf16>
    %c3_27 = arith.constant 3 : index
    %c0_28 = arith.constant 0 : index
    %c0_29 = arith.constant 0 : index
    %43 = vector.load %arg3[%c3_27, %c0_28, %c0_29] : memref<8x1x128xf32, #tpu.memory_space<vmem>>, vector<1x1x128xf32>
    %44 = vector.shape_cast %43 : vector<1x1x128xf32> to vector<1x128xf32>
    %45 = arith.truncf %40 : vector<8x128xf32> to vector<8x128xbf16>
    %cst_30 = arith.constant dense<0.000000e+00> : vector<8x128xf32>
    %46 = tpu.matmul %45, %42, %cst_30 {dimension_numbers = #tpu.dot_dimension_numbers<[1], [0], [0], [1], [0, 0, 1, 1], [], []>} : vector<8x128xbf16>, vector<128x128xbf16>, vector<8x128xf32> -> vector<8x128xf32>
    %47 = vector.broadcast %44 : vector<1x128xf32> to vector<8x128xf32>
    %48 = arith.addf %46, %47 : vector<8x128xf32>
    %cst_31 = arith.constant 0.000000e+00 : f32
    %49 = vector.broadcast %cst_31 : f32 to vector<8x128xf32>
    %50 = arith.maximumf %48, %49 : vector<8x128xf32>
    %c4 = arith.constant 4 : index
    %c0_32 = arith.constant 0 : index
    %c0_33 = arith.constant 0 : index
    %51 = vector.load %arg2[%c4, %c0_32, %c0_33] : memref<8x128x128xbf16, #tpu.memory_space<vmem>>, vector<1x128x128xbf16>
    %52 = vector.shape_cast %51 : vector<1x128x128xbf16> to vector<128x128xbf16>
    %c4_34 = arith.constant 4 : index
    %c0_35 = arith.constant 0 : index
    %c0_36 = arith.constant 0 : index
    %53 = vector.load %arg3[%c4_34, %c0_35, %c0_36] : memref<8x1x128xf32, #tpu.memory_space<vmem>>, vector<1x1x128xf32>
    %54 = vector.shape_cast %53 : vector<1x1x128xf32> to vector<1x128xf32>
    %55 = arith.truncf %50 : vector<8x128xf32> to vector<8x128xbf16>
    %cst_37 = arith.constant dense<0.000000e+00> : vector<8x128xf32>
    %56 = tpu.matmul %55, %52, %cst_37 {dimension_numbers = #tpu.dot_dimension_numbers<[1], [0], [0], [1], [0, 0, 1, 1], [], []>} : vector<8x128xbf16>, vector<128x128xbf16>, vector<8x128xf32> -> vector<8x128xf32>
    %57 = vector.broadcast %54 : vector<1x128xf32> to vector<8x128xf32>
    %58 = arith.addf %56, %57 : vector<8x128xf32>
    %cst_38 = arith.constant 0.000000e+00 : f32
    %59 = vector.broadcast %cst_38 : f32 to vector<8x128xf32>
    %60 = arith.maximumf %58, %59 : vector<8x128xf32>
    %c5 = arith.constant 5 : index
    %c0_39 = arith.constant 0 : index
    %c0_40 = arith.constant 0 : index
    %61 = vector.load %arg2[%c5, %c0_39, %c0_40] : memref<8x128x128xbf16, #tpu.memory_space<vmem>>, vector<1x128x128xbf16>
    %62 = vector.shape_cast %61 : vector<1x128x128xbf16> to vector<128x128xbf16>
    %c5_41 = arith.constant 5 : index
    %c0_42 = arith.constant 0 : index
    %c0_43 = arith.constant 0 : index
    %63 = vector.load %arg3[%c5_41, %c0_42, %c0_43] : memref<8x1x128xf32, #tpu.memory_space<vmem>>, vector<1x1x128xf32>
    %64 = vector.shape_cast %63 : vector<1x1x128xf32> to vector<1x128xf32>
    %65 = arith.truncf %60 : vector<8x128xf32> to vector<8x128xbf16>
    %cst_44 = arith.constant dense<0.000000e+00> : vector<8x128xf32>
    %66 = tpu.matmul %65, %62, %cst_44 {dimension_numbers = #tpu.dot_dimension_numbers<[1], [0], [0], [1], [0, 0, 1, 1], [], []>} : vector<8x128xbf16>, vector<128x128xbf16>, vector<8x128xf32> -> vector<8x128xf32>
    %67 = vector.broadcast %64 : vector<1x128xf32> to vector<8x128xf32>
    %68 = arith.addf %66, %67 : vector<8x128xf32>
    %cst_45 = arith.constant 0.000000e+00 : f32
    %69 = vector.broadcast %cst_45 : f32 to vector<8x128xf32>
    %70 = arith.maximumf %68, %69 : vector<8x128xf32>
    %c6 = arith.constant 6 : index
    %c0_46 = arith.constant 0 : index
    %c0_47 = arith.constant 0 : index
    %71 = vector.load %arg2[%c6, %c0_46, %c0_47] : memref<8x128x128xbf16, #tpu.memory_space<vmem>>, vector<1x128x128xbf16>
    %72 = vector.shape_cast %71 : vector<1x128x128xbf16> to vector<128x128xbf16>
    %c6_48 = arith.constant 6 : index
    %c0_49 = arith.constant 0 : index
    %c0_50 = arith.constant 0 : index
    %73 = vector.load %arg3[%c6_48, %c0_49, %c0_50] : memref<8x1x128xf32, #tpu.memory_space<vmem>>, vector<1x1x128xf32>
    %74 = vector.shape_cast %73 : vector<1x1x128xf32> to vector<1x128xf32>
    %75 = arith.truncf %70 : vector<8x128xf32> to vector<8x128xbf16>
    %cst_51 = arith.constant dense<0.000000e+00> : vector<8x128xf32>
    %76 = tpu.matmul %75, %72, %cst_51 {dimension_numbers = #tpu.dot_dimension_numbers<[1], [0], [0], [1], [0, 0, 1, 1], [], []>} : vector<8x128xbf16>, vector<128x128xbf16>, vector<8x128xf32> -> vector<8x128xf32>
    %77 = vector.broadcast %74 : vector<1x128xf32> to vector<8x128xf32>
    %78 = arith.addf %76, %77 : vector<8x128xf32>
    %cst_52 = arith.constant 0.000000e+00 : f32
    %79 = vector.broadcast %cst_52 : f32 to vector<8x128xf32>
    %80 = arith.maximumf %78, %79 : vector<8x128xf32>
    %c7 = arith.constant 7 : index
    %c0_53 = arith.constant 0 : index
    %c0_54 = arith.constant 0 : index
    %81 = vector.load %arg2[%c7, %c0_53, %c0_54] : memref<8x128x128xbf16, #tpu.memory_space<vmem>>, vector<1x128x128xbf16>
    %82 = vector.shape_cast %81 : vector<1x128x128xbf16> to vector<128x128xbf16>
    %c7_55 = arith.constant 7 : index
    %c0_56 = arith.constant 0 : index
    %c0_57 = arith.constant 0 : index
    %83 = vector.load %arg3[%c7_55, %c0_56, %c0_57] : memref<8x1x128xf32, #tpu.memory_space<vmem>>, vector<1x1x128xf32>
    %84 = vector.shape_cast %83 : vector<1x1x128xf32> to vector<1x128xf32>
    %85 = arith.truncf %80 : vector<8x128xf32> to vector<8x128xbf16>
    %cst_58 = arith.constant dense<0.000000e+00> : vector<8x128xf32>
    %86 = tpu.matmul %85, %82, %cst_58 {dimension_numbers = #tpu.dot_dimension_numbers<[1], [0], [0], [1], [0, 0, 1, 1], [], []>} : vector<8x128xbf16>, vector<128x128xbf16>, vector<8x128xf32> -> vector<8x128xf32>
    %87 = vector.broadcast %84 : vector<1x128xf32> to vector<8x128xf32>
    %88 = arith.addf %86, %87 : vector<8x128xf32>
    %c0_59 = arith.constant 0 : index
    %c0_60 = arith.constant 0 : index
    %89 = vector.load %arg4[%c0_59, %c0_60] : memref<8x128xf32, #tpu.memory_space<vmem>>, vector<8x128xf32>
    tpu.vector_store %arg4[%c0_59, %c0_60], %88 {strides = array<i32>} : memref<8x128xf32, #tpu.memory_space<vmem>>, vector<8x128xf32>,
    return
  }
  func.func @transform_0(%arg0: i32) -> (i32, i32) {
    %c0_i32 = arith.constant 0 : i32
    %c0_i32_0 = arith.constant 0 : i32
    return %arg0, %c0_i32 : i32, i32
  }
  func.func @transform_1(%arg0: i32) -> (i32, i32, i32) {
    %c0_i32 = arith.constant 0 : i32
    %c0_i32_0 = arith.constant 0 : i32
    %c0_i32_1 = arith.constant 0 : i32
    %c0_i32_2 = arith.constant 0 : i32
    return %c0_i32, %c0_i32_0, %c0_i32_1 : i32, i32, i32
  }
  func.func @transform_2(%arg0: i32) -> (i32, i32, i32) {
    %c0_i32 = arith.constant 0 : i32
    %c0_i32_0 = arith.constant 0 : i32
    %c0_i32_1 = arith.constant 0 : i32
    %c0_i32_2 = arith.constant 0 : i32
    return %c0_i32, %c0_i32_0, %c0_i32_1 : i32, i32, i32
  }
  func.func @transform_3(%arg0: i32) -> (i32, i32) {
    %c0_i32 = arith.constant 0 : i32
    %c0_i32_0 = arith.constant 0 : i32
    return %arg0, %c0_i32 : i32, i32
  }
}

module attributes {stable_mosaic.version = 11 : i64} {
  func.func @_mapping_kernel(%arg0: i32, %arg1: memref<8x128xf32, #tpu.memory_space<vmem>>, %arg2: memref<8x128x128xbf16, #tpu.memory_space<vmem>>, %arg3: memref<8x1x128xf32, #tpu.memory_space<vmem>>, %arg4: memref<8x128xf32, #tpu.memory_space<vmem>>) attributes {dimension_semantics = [#tpu.dimension_semantics<parallel>], iteration_bounds = array<i64: 1>, scalar_prefetch = 0 : i64, scratch_operands = 0 : i64, tpu.core_type = #tpu.core_type<tc>, window_params = [{transform_indices = @transform_0, window_bounds = array<i64: 8, 128>}, {pipeline_mode = #tpu.pipeline_mode<synchronous>, transform_indices = @transform_1, window_bounds = array<i64: 8, 128, 128>}, {pipeline_mode = #tpu.pipeline_mode<synchronous>, transform_indices = @transform_2, window_bounds = array<i64: 8, 1, 128>}, {transform_indices = @transform_3, window_bounds = array<i64: 8, 128>}]} {
    %c0 = arith.constant 0 : index
    %c0_0 = arith.constant 0 : index
    %0 = vector.load %arg1[%c0, %c0_0] : memref<8x128xf32, #tpu.memory_space<vmem>>, vector<8x128xf32>
    %1 = arith.mulf %0, %0 : vector<8x128xf32>
    %cst = arith.constant dense<0.000000e+00> : vector<8xf32>
    %2 = vector.multi_reduction <add>, %1, %cst [1] : vector<8x128xf32> to vector<8xf32>
    %3 = vector.shape_cast %2 : vector<8xf32> to vector<8x1xf32>
    %cst_1 = arith.constant 3.125000e-02 : f32
    %4 = vector.broadcast %cst_1 : f32 to vector<8x1xf32>
    %5 = arith.mulf %3, %4 : vector<8x1xf32>
    %cst_2 = arith.constant 9.99999993E-9 : f32
    %6 = vector.broadcast %cst_2 : f32 to vector<8x1xf32>
    %7 = arith.addf %5, %6 : vector<8x1xf32>
    %8 = math.rsqrt %7 : vector<8x1xf32>
    %9 = vector.broadcast %8 : vector<8x1xf32> to vector<8x128xf32>
    %10 = arith.mulf %0, %9 : vector<8x128xf32>
    %c0_3 = arith.constant 0 : index
    %c0_4 = arith.constant 0 : index
    %c0_5 = arith.constant 0 : index
    %11 = vector.load %arg2[%c0_3, %c0_4, %c0_5] : memref<8x128x128xbf16, #tpu.memory_space<vmem>>, vector<1x128x128xbf16>
    %12 = vector.shape_cast %11 : vector<1x128x128xbf16> to vector<128x128xbf16>
    %c0_6 = arith.constant 0 : index
    %c0_7 = arith.constant 0 : index
    %c0_8 = arith.constant 0 : index
    %13 = vector.load %arg3[%c0_6, %c0_7, %c0_8] : memref<8x1x128xf32, #tpu.memory_space<vmem>>, vector<1x1x128xf32>
    %14 = vector.shape_cast %13 : vector<1x1x128xf32> to vector<1x128xf32>
    %15 = arith.truncf %10 : vector<8x128xf32> to vector<8x128xbf16>
    %cst_9 = arith.constant dense<0.000000e+00> : vector<8x128xf32>
    %16 = tpu.matmul %15, %12, %cst_9 {dimension_numbers = #tpu.dot_dimension_numbers<[1], [0], [0], [1], [0, 0, 1, 1], [], []>} : vector<8x128xbf16>, vector<128x128xbf16>, vector<8x128xf32> -> vector<8x128xf32>
    %17 = vector.broadcast %14 : vector<1x128xf32> to vector<8x128xf32>
    %18 = arith.addf %16, %17 : vector<8x128xf32>
    %cst_10 = arith.constant 0.000000e+00 : f32
    %19 = vector.broadcast %cst_10 : f32 to vector<8x128xf32>
    %20 = arith.maximumf %18, %19 : vector<8x128xf32>
    %c1 = arith.constant 1 : index
    %c0_11 = arith.constant 0 : index
    %c0_12 = arith.constant 0 : index
    %21 = vector.load %arg2[%c1, %c0_11, %c0_12] : memref<8x128x128xbf16, #tpu.memory_space<vmem>>, vector<1x128x128xbf16>
    %22 = vector.shape_cast %21 : vector<1x128x128xbf16> to vector<128x128xbf16>
    %c1_13 = arith.constant 1 : index
    %c0_14 = arith.constant 0 : index
    %c0_15 = arith.constant 0 : index
    %23 = vector.load %arg3[%c1_13, %c0_14, %c0_15] : memref<8x1x128xf32, #tpu.memory_space<vmem>>, vector<1x1x128xf32>
    %24 = vector.shape_cast %23 : vector<1x1x128xf32> to vector<1x128xf32>
    %25 = arith.truncf %20 : vector<8x128xf32> to vector<8x128xbf16>
    %cst_16 = arith.constant dense<0.000000e+00> : vector<8x128xf32>
    %26 = tpu.matmul %25, %22, %cst_16 {dimension_numbers = #tpu.dot_dimension_numbers<[1], [0], [0], [1], [0, 0, 1, 1], [], []>} : vector<8x128xbf16>, vector<128x128xbf16>, vector<8x128xf32> -> vector<8x128xf32>
    %27 = vector.broadcast %24 : vector<1x128xf32> to vector<8x128xf32>
    %28 = arith.addf %26, %27 : vector<8x128xf32>
    %cst_17 = arith.constant 0.000000e+00 : f32
    %29 = vector.broadcast %cst_17 : f32 to vector<8x128xf32>
    %30 = arith.maximumf %28, %29 : vector<8x128xf32>
    %c2 = arith.constant 2 : index
    %c0_18 = arith.constant 0 : index
    %c0_19 = arith.constant 0 : index
    %31 = vector.load %arg2[%c2, %c0_18, %c0_19] : memref<8x128x128xbf16, #tpu.memory_space<vmem>>, vector<1x128x128xbf16>
    %32 = vector.shape_cast %31 : vector<1x128x128xbf16> to vector<128x128xbf16>
    %c2_20 = arith.constant 2 : index
    %c0_21 = arith.constant 0 : index
    %c0_22 = arith.constant 0 : index
    %33 = vector.load %arg3[%c2_20, %c0_21, %c0_22] : memref<8x1x128xf32, #tpu.memory_space<vmem>>, vector<1x1x128xf32>
    %34 = vector.shape_cast %33 : vector<1x1x128xf32> to vector<1x128xf32>
    %35 = arith.truncf %30 : vector<8x128xf32> to vector<8x128xbf16>
    %cst_23 = arith.constant dense<0.000000e+00> : vector<8x128xf32>
    %36 = tpu.matmul %35, %32, %cst_23 {dimension_numbers = #tpu.dot_dimension_numbers<[1], [0], [0], [1], [0, 0, 1, 1], [], []>} : vector<8x128xbf16>, vector<128x128xbf16>, vector<8x128xf32> -> vector<8x128xf32>
    %37 = vector.broadcast %34 : vector<1x128xf32> to vector<8x128xf32>
    %38 = arith.addf %36, %37 : vector<8x128xf32>
    %cst_24 = arith.constant 0.000000e+00 : f32
    %39 = vector.broadcast %cst_24 : f32 to vector<8x128xf32>
    %40 = arith.maximumf %38, %39 : vector<8x128xf32>
    %c3 = arith.constant 3 : index
    %c0_25 = arith.constant 0 : index
    %c0_26 = arith.constant 0 : index
    %41 = vector.load %arg2[%c3, %c0_25, %c0_26] : memref<8x128x128xbf16, #tpu.memory_space<vmem>>, vector<1x128x128xbf16>
    %42 = vector.shape_cast %41 : vector<1x128x128xbf16> to vector<128x128xbf16>
    %c3_27 = arith.constant 3 : index
    %c0_28 = arith.constant 0 : index
    %c0_29 = arith.constant 0 : index
    %43 = vector.load %arg3[%c3_27, %c0_28, %c0_29] : memref<8x1x128xf32, #tpu.memory_space<vmem>>, vector<1x1x128xf32>
    %44 = vector.shape_cast %43 : vector<1x1x128xf32> to vector<1x128xf32>
    %45 = arith.truncf %40 : vector<8x128xf32> to vector<8x128xbf16>
    %cst_30 = arith.constant dense<0.000000e+00> : vector<8x128xf32>
    %46 = tpu.matmul %45, %42, %cst_30 {dimension_numbers = #tpu.dot_dimension_numbers<[1], [0], [0], [1], [0, 0, 1, 1], [], []>} : vector<8x128xbf16>, vector<128x128xbf16>, vector<8x128xf32> -> vector<8x128xf32>
    %47 = vector.broadcast %44 : vector<1x128xf32> to vector<8x128xf32>
    %48 = arith.addf %46, %47 : vector<8x128xf32>
    %cst_31 = arith.constant 0.000000e+00 : f32
    %49 = vector.broadcast %cst_31 : f32 to vector<8x128xf32>
    %50 = arith.maximumf %48, %49 : vector<8x128xf32>
    %c4 = arith.constant 4 : index
    %c0_32 = arith.constant 0 : index
    %c0_33 = arith.constant 0 : index
    %51 = vector.load %arg2[%c4, %c0_32, %c0_33] : memref<8x128x128xbf16, #tpu.memory_space<vmem>>, vector<1x128x128xbf16>
    %52 = vector.shape_cast %51 : vector<1x128x128xbf16> to vector<128x128xbf16>
    %c4_34 = arith.constant 4 : index
    %c0_35 = arith.constant 0 : index
    %c0_36 = arith.constant 0 : index
    %53 = vector.load %arg3[%c4_34, %c0_35, %c0_36] : memref<8x1x128xf32, #tpu.memory_space<vmem>>, vector<1x1x128xf32>
    %54 = vector.shape_cast %53 : vector<1x1x128xf32> to vector<1x128xf32>
    %55 = arith.truncf %50 : vector<8x128xf32> to vector<8x128xbf16>
    %cst_37 = arith.constant dense<0.000000e+00> : vector<8x128xf32>
    %56 = tpu.matmul %55, %52, %cst_37 {dimension_numbers = #tpu.dot_dimension_numbers<[1], [0], [0], [1], [0, 0, 1, 1], [], []>} : vector<8x128xbf16>, vector<128x128xbf16>, vector<8x128xf32> -> vector<8x128xf32>
    %57 = vector.broadcast %54 : vector<1x128xf32> to vector<8x128xf32>
    %58 = arith.addf %56, %57 : vector<8x128xf32>
    %cst_38 = arith.constant 0.000000e+00 : f32
    %59 = vector.broadcast %cst_38 : f32 to vector<8x128xf32>
    %60 = arith.maximumf %58, %59 : vector<8x128xf32>
    %c5 = arith.constant 5 : index
    %c0_39 = arith.constant 0 : index
    %c0_40 = arith.constant 0 : index
    %61 = vector.load %arg2[%c5, %c0_39, %c0_40] : memref<8x128x128xbf16, #tpu.memory_space<vmem>>, vector<1x128x128xbf16>
    %62 = vector.shape_cast %61 : vector<1x128x128xbf16> to vector<128x128xbf16>
    %c5_41 = arith.constant 5 : index
    %c0_42 = arith.constant 0 : index
    %c0_43 = arith.constant 0 : index
    %63 = vector.load %arg3[%c5_41, %c0_42, %c0_43] : memref<8x1x128xf32, #tpu.memory_space<vmem>>, vector<1x1x128xf32>
    %64 = vector.shape_cast %63 : vector<1x1x128xf32> to vector<1x128xf32>
    %65 = arith.truncf %60 : vector<8x128xf32> to vector<8x128xbf16>
    %cst_44 = arith.constant dense<0.000000e+00> : vector<8x128xf32>
    %66 = tpu.matmul %65, %62, %cst_44 {dimension_numbers = #tpu.dot_dimension_numbers<[1], [0], [0], [1], [0, 0, 1, 1], [], []>} : vector<8x128xbf16>, vector<128x128xbf16>, vector<8x128xf32> -> vector<8x128xf32>
    %67 = vector.broadcast %64 : vector<1x128xf32> to vector<8x128xf32>
    %68 = arith.addf %66, %67 : vector<8x128xf32>
    %cst_45 = arith.constant 0.000000e+00 : f32
    %69 = vector.broadcast %cst_45 : f32 to vector<8x128xf32>
    %70 = arith.maximumf %68, %69 : vector<8x128xf32>
    %c6 = arith.constant 6 : index
    %c0_46 = arith.constant 0 : index
    %c0_47 = arith.constant 0 : index
    %71 = vector.load %arg2[%c6, %c0_46, %c0_47] : memref<8x128x128xbf16, #tpu.memory_space<vmem>>, vector<1x128x128xbf16>
    %72 = vector.shape_cast %71 : vector<1x128x128xbf16> to vector<128x128xbf16>
    %c6_48 = arith.constant 6 : index
    %c0_49 = arith.constant 0 : index
    %c0_50 = arith.constant 0 : index
    %73 = vector.load %arg3[%c6_48, %c0_49, %c0_50] : memref<8x1x128xf32, #tpu.memory_space<vmem>>, vector<1x1x128xf32>
    %74 = vector.shape_cast %73 : vector<1x1x128xf32> to vector<1x128xf32>
    %75 = arith.truncf %70 : vector<8x128xf32> to vector<8x128xbf16>
    %cst_51 = arith.constant dense<0.000000e+00> : vector<8x128xf32>
    %76 = tpu.matmul %75, %72, %cst_51 {dimension_numbers = #tpu.dot_dimension_numbers<[1], [0], [0], [1], [0, 0, 1, 1], [], []>} : vector<8x128xbf16>, vector<128x128xbf16>, vector<8x128xf32> -> vector<8x128xf32>
    %77 = vector.broadcast %74 : vector<1x128xf32> to vector<8x128xf32>
    %78 = arith.addf %76, %77 : vector<8x128xf32>
    %cst_52 = arith.constant 0.000000e+00 : f32
    %79 = vector.broadcast %cst_52 : f32 to vector<8x128xf32>
    %80 = arith.maximumf %78, %79 : vector<8x128xf32>
    %c7 = arith.constant 7 : index
    %c0_53 = arith.constant 0 : index
    %c0_54 = arith.constant 0 : index
    %81 = vector.load %arg2[%c7, %c0_53, %c0_54] : memref<8x128x128xbf16, #tpu.memory_space<vmem>>, vector<1x128x128xbf16>
    %82 = vector.shape_cast %81 : vector<1x128x128xbf16> to vector<128x128xbf16>
    %c7_55 = arith.constant 7 : index
    %c0_56 = arith.constant 0 : index
    %c0_57 = arith.constant 0 : index
    %83 = vector.load %arg3[%c7_55, %c0_56, %c0_57] : memref<8x1x128xf32, #tpu.memory_space<vmem>>, vector<1x1x128xf32>
    %84 = vector.shape_cast %83 : vector<1x1x128xf32> to vector<1x128xf32>
    %85 = arith.truncf %80 : vector<8x128xf32> to vector<8x128xbf16>
    %cst_58 = arith.constant dense<0.000000e+00> : vector<8x128xf32>
    %86 = tpu.matmul %85, %82, %cst_58 {dimension_numbers = #tpu.dot_dimension_numbers<[1], [0], [0], [1], [0, 0, 1, 1], [], []>} : vector<8x128xbf16>, vector<128x128xbf16>, vector<8x128xf32> -> vector<8x128xf32>
    %87 = vector.broadcast %84 : vector<1x128xf32> to vector<8x128xf32>
    %88 = arith.addf %86, %87 : vector<8x128xf32>
    %c0_59 = arith.constant 0 : index
    %c0_60 = arith.constant 0 : index
    %89 = vector.load %arg4[%c0_59, %c0_60] : memref<8x128xf32, #tpu.memory_space<vmem>>, vector<8x128xf32>
    tpu.vector_store %arg4[%c0_59, %c0_60], %88 {strides = array<i32>} : memref<8x128xf32, #tpu.memory_space<vmem>>, vector<8x128xf32>,
    return
  }
  func.func @transform_0(%arg0: i32) -> (i32, i32) {
    %c0_i32 = arith.constant 0 : i32
    %c0_i32_0 = arith.constant 0 : i32
    return %arg0, %c0_i32 : i32, i32
  }
  func.func @transform_1(%arg0: i32) -> (i32, i32, i32) {
    %c0_i32 = arith.constant 0 : i32
    %c0_i32_0 = arith.constant 0 : i32
    %c0_i32_1 = arith.constant 0 : i32
    %c0_i32_2 = arith.constant 0 : i32
    return %c0_i32, %c0_i32_0, %c0_i32_1 : i32, i32, i32
  }
  func.func @transform_2(%arg0: i32) -> (i32, i32, i32) {
    %c0_i32 = arith.constant 0 : i32
    %c0_i32_0 = arith.constant 0 : i32
    %c0_i32_1 = arith.constant 0 : i32
    %c0_i32_2 = arith.constant 0 : i32
    return %c0_i32, %c0_i32_0, %c0_i32_1 : i32, i32, i32
  }
  func.func @transform_3(%arg0: i32) -> (i32, i32) {
    %c0_i32 = arith.constant 0 : i32
    %c0_i32_0 = arith.constant 0 : i32
    return %arg0, %c0_i32 : i32, i32
  }
}

</mosaic_0001>

<llo_original>
// kernel: tpu_custom_call.1
$region0: #{tpu_custom_call.1}
  #allocation0 [shape = 'u32[]', space=smem, size = 0x4, offset = 0x4, fixed_abs, tag = 'smem constant byte address 0x4 - core index']
  #allocation1 [shape = 'u32[144,128]{1,0:T(1,128)}', space=vmem, size = 0x12000, scoped, tag = 'internal scratch']
  %s0 = inlined_call_operand.hbm [shape: f32[8,128], index: 0, kind: input, shape index: {}]
  %s1 = inlined_call_operand.hbm [shape: bf16[8,128,128], index: 1, kind: input, shape index: {}]
  %s2 = inlined_call_operand.hbm [shape: f32[8,1,128], index: 2, kind: input, shape index: {}]
  %s3 = inlined_call_operand.hbm [shape: f32[8,128], index: 3, kind: output, shape index: {}]
  %s4 = sld [smem:[#allocation0]]
  $region34: #{tpu_custom_call.1} parent=0
    _
  %s6 = ssub.s32 1, %s4
  %s7 = scalar_select 0, %s6, %s4
  $region1: #{tpu_custom_call.1} parent=0
    #allocation2 [shape = 'u8[4096]{0}', space=vmem, size = 0x1000, scoped, tag = 'input window, operand 0, single buffered']
    #allocation3 [shape = 's32[1]{0}', space=sflag, size = 0x4, scoped, tag = 'scoped memory for tpu_custom_call.1']
    #allocation4 [shape = 's32[1]{0}', space=sflag, size = 0x4, scoped, tag = 'scoped memory for tpu_custom_call.1']
    #allocation5 [shape = 'u8[262144]{0}', space=vmem, size = 0x40000, scoped, tag = 'input window, operand 1, single buffered']
    #allocation6 [shape = 's32[1]{0}', space=sflag, size = 0x4, scoped, tag = 'scoped memory for tpu_custom_call.1']
    #allocation7 [shape = 'u8[4096]{0}', space=vmem, size = 0x1000, scoped, tag = 'input window, operand 2, single buffered']
    #allocation8 [shape = 'u8[4096]{0}', space=vmem, size = 0x1000, scoped, tag = 'output window, operand 0, single buffered']
    %8 = vsyncpa [#allocation3], 0
    %9 = vsyncpa [#allocation6], 0
    %10 = vsyncpa [#allocation4], 0
    // Predicated region
    $region2: #{tpu_custom_call.1} parent=1 // pred_check
      _
    $region3: #{tpu_custom_call.1} parent=1 // pred_check_branch
      %12 = sbr.rel (0) target = $region5
    $region4: #{tpu_custom_call.1} parent=1 // pred_region
      %s14 = ssub.s32 128, 128
      %15 = vsyncadd [#allocation3], %s14
      %s17 = sshll.u32 [#allocation2], 4
      %s18 = int_to_ptr.vmem [resolvable:$true] %s17
      %20 = dma.hbm_to_vmem [thread:$0]  %s0, 128, %s18, [#allocation3]
    $region5: #{tpu_custom_call.1} parent=1 // pred_fallthru
      _
    // Predicated region
    $region6: #{tpu_custom_call.1} parent=1 // pred_check
      _
    $region7: #{tpu_custom_call.1} parent=1 // pred_check_branch
      %22 = sbr.rel (0) target = $region9
    $region8: #{tpu_custom_call.1} parent=1 // pred_region
      %s24 = ssub.s32 8192, 8192
      %25 = vsyncadd [#allocation6], %s24
      %s26 = sshll.u32 [#allocation5], 4
      %s27 = int_to_ptr.vmem [resolvable:$true] %s26
      %32 = dma.hbm_to_vmem [thread:$0]  %s1, 8192, %s27, [#allocation6], 64, 64, 4
    $region9: #{tpu_custom_call.1} parent=1 // pred_fallthru
      _
    // Predicated region
    $region10: #{tpu_custom_call.1} parent=1 // pred_check
      _
    $region11: #{tpu_custom_call.1} parent=1 // pred_check_branch
      %34 = sbr.rel (0) target = $region13
    $region12: #{tpu_custom_call.1} parent=1 // pred_region
      %s36 = ssub.s32 128, 128
      %37 = vsyncadd [#allocation6], %s36
      %s38 = sshll.u32 [#allocation7], 4
      %s39 = int_to_ptr.vmem [resolvable:$true] %s38
      %44 = dma.hbm_to_vmem [thread:$0]  %s2, 128, %s39, [#allocation6], 16, 16, 1
    $region13: #{tpu_custom_call.1} parent=1 // pred_fallthru
      _
    // Predicated region
    $region14: #{tpu_custom_call.1} parent=1 // pred_check
      _
    $region15: #{tpu_custom_call.1} parent=1 // pred_check_branch
      %46 = sbr.rel (0) target = $region17
    $region16: #{tpu_custom_call.1} parent=1 // pred_region
      %47 = dma.done [#allocation3], 128
    $region17: #{tpu_custom_call.1} parent=1 // pred_fallthru
      _
    // Predicated region
    $region18: #{tpu_custom_call.1} parent=1 // pred_check
      _
    $region19: #{tpu_custom_call.1} parent=1 // pred_check_branch
      %49 = sbr.rel (0) target = $region21
    $region20: #{tpu_custom_call.1} parent=1 // pred_region
      %50 = dma.done [#allocation6], 8192
    $region21: #{tpu_custom_call.1} parent=1 // pred_fallthru
      _
    // Predicated region
    $region22: #{tpu_custom_call.1} parent=1 // pred_check
      _
    $region23: #{tpu_custom_call.1} parent=1 // pred_check_branch
      %52 = sbr.rel (0) target = $region25
    $region24: #{tpu_custom_call.1} parent=1 // pred_region
      %53 = dma.done [#allocation6], 128
    $region25: #{tpu_custom_call.1} parent=1 // pred_fallthru
      _
    %v55 = vld [vmem:[#allocation2] sm:$0xff]
    %v56 = vmul.f32 %v55, %v55
    %57 = vadd.xlane.f32.xlu0 %v56
    %v58 = vpop.xlane.xlu0 %57
    %v59 = vmul.f32 %v58, 0.03125
    %v60 = vadd.f32 %v59, 1e-08
    %v61 = vrsqrt.pop %v60
    %v62 = vmul.f32 %v55, %v61
    %v63 = vld [vmem:[#allocation5] sm:$0xf]
    %v64 = vld [vmem:[#allocation5 + $0x4] sm:$0xf]
    %v65 = vld [vmem:[#allocation5 + $0x8] sm:$0xf]
    %v66 = vld [vmem:[#allocation5 + $0xc] sm:$0xf]
    %v67 = vld [vmem:[#allocation5 + $0x10] sm:$0xf]
    %v68 = vld [vmem:[#allocation5 + $0x14] sm:$0xf]
    %v69 = vld [vmem:[#allocation5 + $0x18] sm:$0xf]
    %v70 = vld [vmem:[#allocation5 + $0x1c] sm:$0xf]
    %v71 = vld [vmem:[#allocation5 + $0x20] sm:$0xf]
    %v72 = vld [vmem:[#allocation5 + $0x24] sm:$0xf]
    %v73 = vld [vmem:[#allocation5 + $0x28] sm:$0xf]
    %v74 = vld [vmem:[#allocation5 + $0x2c] sm:$0xf]
    %v75 = vld [vmem:[#allocation5 + $0x30] sm:$0xf]
    %v76 = vld [vmem:[#allocation5 + $0x34] sm:$0xf]
    %v77 = vld [vmem:[#allocation5 + $0x38] sm:$0xf]
    %v78 = vld [vmem:[#allocation5 + $0x3c] sm:$0xf]
    %v79 = vld [vmem:[#allocation7] sm:$0x1]
    %v80 = vpack.c.bf16 %v62, %v62
    %v82 = vlaneseq
    %v83 = vshrl.u32 %v82, 7
    %v84 = vsub.s32 0, %v83
    %v85 = vrot.slane %v79, %v84
    %v103 = vunpack.c.l.b16 %v63
    %v104 = vunpack.c.l.b16 %v64
    %v105 = vunpack.c.l.b16 %v65
    %v106 = vunpack.c.l.b16 %v66
    %v107 = vunpack.c.l.b16 %v67
    %v108 = vunpack.c.l.b16 %v68
    %v109 = vunpack.c.l.b16 %v69
    %v110 = vunpack.c.l.b16 %v70
    %v111 = vunpack.c.l.b16 %v71
    %v112 = vunpack.c.l.b16 %v72
    %v113 = vunpack.c.l.b16 %v73
    %v114 = vunpack.c.l.b16 %v74
    %v115 = vunpack.c.l.b16 %v75
    %v116 = vunpack.c.l.b16 %v76
    %v117 = vunpack.c.l.b16 %v77
    %v118 = vunpack.c.l.b16 %v78
    %v119 = vpack.c.b16 %v104, %v103
    %v120 = vpack.c.b16 %v106, %v105
    %v121 = vpack.c.b16 %v108, %v107
    %v122 = vpack.c.b16 %v110, %v109
    %v123 = vpack.c.b16 %v112, %v111
    %v124 = vpack.c.b16 %v114, %v113
    %v125 = vpack.c.b16 %v116, %v115
    %v126 = vpack.c.b16 %v118, %v117
    %135 = vmatprep.subr.bf16.mxu0 0
    %136 = vmatpush1.bf16.msra.mxu0 %v119
    %137 = vmatprep.subr.bf16.mxu0 0
    %138 = vmatpush1.bf16.msra.mxu0 %v120
    %139 = vmatprep.subr.bf16.mxu0 0
    %140 = vmatpush1.bf16.msra.mxu0 %v121
    %141 = vmatprep.subr.bf16.mxu0 0
    %142 = vmatpush1.bf16.msra.mxu0 %v122
    %143 = vmatprep.subr.bf16.mxu0 0
    %144 = vmatpush1.bf16.msra.mxu0 %v123
    %145 = vmatprep.subr.bf16.mxu0 0
    %146 = vmatpush1.bf16.msra.mxu0 %v124
    %147 = vmatprep.subr.bf16.mxu0 0
    %148 = vmatpush1.bf16.msra.mxu0 %v125
    %149 = vmatprep.subr.bf16.mxu0 0
    %150 = vmatpush1.bf16.msra.mxu0 %v126
    %151 = vmatprep.subr.bf16.mxu0 0
    %152 = vmatpush1.bf16.msra.mxu0 0
    %153 = vmatprep.subr.bf16.mxu0 0
    %154 = vmatpush1.bf16.msra.mxu0 0
    %155 = vmatprep.subr.bf16.mxu0 0
    %156 = vmatpush1.bf16.msra.mxu0 0
    %157 = vmatprep.subr.bf16.mxu0 0
    %158 = vmatpush1.bf16.msra.mxu0 0
    %159 = vmatprep.subr.bf16.mxu0 0
    %160 = vmatpush1.bf16.msra.mxu0 0
    %161 = vmatprep.subr.bf16.mxu0 0
    %162 = vmatpush1.bf16.msra.mxu0 0
    %163 = vmatprep.subr.bf16.mxu0 0
    %164 = vmatpush1.bf16.msra.mxu0 0
    %165 = vmatprep.subr.bf16.mxu0 0
    %166 = vmatpush1.bf16.msra.mxu0 0
    %167 = vmatprep.mubr.bf16.mxu0 0
    %168 = vmatmul.mubr.bf16.gmra.mrb[0].mxu0 %v80
    %v169 = vpop.f32.mrb[0].mxu0
    %v170 = vadd.f32 %v85, %v169
    %v171 = vpop.f32.mrb[0].mxu0
    %v172 = vpop.f32.mrb[0].mxu0
    %v173 = vpop.f32.mrb[0].mxu0
    %174 = vdwg.mxu0
    %v175 = vmax.f32 %v170, 0.0
    %s176 = scalar_lea.vmem [#allocation5], 64
    %v177 = vld [vmem:[%s176] sm:$0xf]
    %v178 = vld [vmem:[%s176 + $0x4] sm:$0xf]
    %v179 = vld [vmem:[%s176 + $0x8] sm:$0xf]
    %v180 = vld [vmem:[%s176 + $0xc] sm:$0xf]
    %v181 = vld [vmem:[%s176 + $0x10] sm:$0xf]
    %v182 = vld [vmem:[%s176 + $0x14] sm:$0xf]
    %v183 = vld [vmem:[%s176 + $0x18] sm:$0xf]
    %v184 = vld [vmem:[%s176 + $0x1c] sm:$0xf]
    %v185 = vld [vmem:[%s176 + $0x20] sm:$0xf]
    %v186 = vld [vmem:[%s176 + $0x24] sm:$0xf]
    %v187 = vld [vmem:[%s176 + $0x28] sm:$0xf]
    %v188 = vld [vmem:[%s176 + $0x2c] sm:$0xf]
    %v189 = vld [vmem:[%s176 + $0x30] sm:$0xf]
    %v190 = vld [vmem:[%s176 + $0x34] sm:$0xf]
    %v191 = vld [vmem:[%s176 + $0x38] sm:$0xf]
    %v192 = vld [vmem:[%s176 + $0x3c] sm:$0xf]
    %s193 = scalar_lea.vmem [#allocation7], 1
    %v194 = vld [vmem:[%s193] sm:$0x1]
    %v195 = vpack.c.bf16 %v175, %v175
    %v197 = vlaneseq
    %v198 = vshrl.u32 %v197, 7
    %v199 = vsub.s32 0, %v198
    %v200 = vrot.slane %v194, %v199
    %v218 = vunpack.c.l.b16 %v177
    %v219 = vunpack.c.l.b16 %v178
    %v220 = vunpack.c.l.b16 %v179
    %v221 = vunpack.c.l.b16 %v180
    %v222 = vunpack.c.l.b16 %v181
    %v223 = vunpack.c.l.b16 %v182
    %v224 = vunpack.c.l.b16 %v183
    %v225 = vunpack.c.l.b16 %v184
    %v226 = vunpack.c.l.b16 %v185
    %v227 = vunpack.c.l.b16 %v186
    %v228 = vunpack.c.l.b16 %v187
    %v229 = vunpack.c.l.b16 %v188
    %v230 = vunpack.c.l.b16 %v189
    %v231 = vunpack.c.l.b16 %v190
    %v232 = vunpack.c.l.b16 %v191
    %v233 = vunpack.c.l.b16 %v192
    %v234 = vpack.c.b16 %v219, %v218
    %v235 = vpack.c.b16 %v221, %v220
    %v236 = vpack.c.b16 %v223, %v222
    %v237 = vpack.c.b16 %v225, %v224
    %v238 = vpack.c.b16 %v227, %v226
    %v239 = vpack.c.b16 %v229, %v228
    %v240 = vpack.c.b16 %v231, %v230
    %v241 = vpack.c.b16 %v233, %v232
    %250 = vmatprep.subr.bf16.mxu0 0
    %251 = vmatpush1.bf16.msra.mxu0 %v234
    %252 = vmatprep.subr.bf16.mxu0 0
    %253 = vmatpush1.bf16.msra.mxu0 %v235
    %254 = vmatprep.subr.bf16.mxu0 0
    %255 = vmatpush1.bf16.msra.mxu0 %v236
    %256 = vmatprep.subr.bf16.mxu0 0
    %257 = vmatpush1.bf16.msra.mxu0 %v237
    %258 = vmatprep.subr.bf16.mxu0 0
    %259 = vmatpush1.bf16.msra.mxu0 %v238
    %260 = vmatprep.subr.bf16.mxu0 0
    %261 = vmatpush1.bf16.msra.mxu0 %v239
    %262 = vmatprep.subr.bf16.mxu0 0
    %263 = vmatpush1.bf16.msra.mxu0 %v240
    %264 = vmatprep.subr.bf16.mxu0 0
    %265 = vmatpush1.bf16.msra.mxu0 %v241
    %266 = vmatprep.subr.bf16.mxu0 0
    %267 = vmatpush1.bf16.msra.mxu0 0
    %268 = vmatprep.subr.bf16.mxu0 0
    %269 = vmatpush1.bf16.msra.mxu0 0
    %270 = vmatprep.subr.bf16.mxu0 0
    %271 = vmatpush1.bf16.msra.mxu0 0
    %272 = vmatprep.subr.bf16.mxu0 0
    %273 = vmatpush1.bf16.msra.mxu0 0
    %274 = vmatprep.subr.bf16.mxu0 0
    %275 = vmatpush1.bf16.msra.mxu0 0
    %276 = vmatprep.subr.bf16.mxu0 0
    %277 = vmatpush1.bf16.msra.mxu0 0
    %278 = vmatprep.subr.bf16.mxu0 0
    %279 = vmatpush1.bf16.msra.mxu0 0
    %280 = vmatprep.subr.bf16.mxu0 0
    %281 = vmatpush1.bf16.msra.mxu0 0
    %282 = vmatprep.mubr.bf16.mxu0 0
    %283 = vmatmul.mubr.bf16.gmra.mrb[0].mxu0 %v195
    %v284 = vpop.f32.mrb[0].mxu0
    %v285 = vadd.f32 %v200, %v284
    %v286 = vpop.f32.mrb[0].mxu0
    %v287 = vpop.f32.mrb[0].mxu0
    %v288 = vpop.f32.mrb[0].mxu0
    %289 = vdwg.mxu0
    %v290 = vmax.f32 %v285, 0.0
    %s291 = scalar_lea.vmem [#allocation5], 128
    %v292 = vld [vmem:[%s291] sm:$0xf]
    %v293 = vld [vmem:[%s291 + $0x4] sm:$0xf]
    %v294 = vld [vmem:[%s291 + $0x8] sm:$0xf]
    %v295 = vld [vmem:[%s291 + $0xc] sm:$0xf]
    %v296 = vld [vmem:[%s291 + $0x10] sm:$0xf]
    %v297 = vld [vmem:[%s291 + $0x14] sm:$0xf]
    %v298 = vld [vmem:[%s291 + $0x18] sm:$0xf]
    %v299 = vld [vmem:[%s291 + $0x1c] sm:$0xf]
    %v300 = vld [vmem:[%s291 + $0x20] sm:$0xf]
    %v301 = vld [vmem:[%s291 + $0x24] sm:$0xf]
    %v302 = vld [vmem:[%s291 + $0x28] sm:$0xf]
    %v303 = vld [vmem:[%s291 + $0x2c] sm:$0xf]
    %v304 = vld [vmem:[%s291 + $0x30] sm:$0xf]
    %v305 = vld [vmem:[%s291 + $0x34] sm:$0xf]
    %v306 = vld [vmem:[%s291 + $0x38] sm:$0xf]
    %v307 = vld [vmem:[%s291 + $0x3c] sm:$0xf]
    %s308 = scalar_lea.vmem [#allocation7], 2
    %v309 = vld [vmem:[%s308] sm:$0x1]
    %v310 = vpack.c.bf16 %v290, %v290
    %v312 = vlaneseq
    %v313 = vshrl.u32 %v312, 7
    %v314 = vsub.s32 0, %v313
    %v315 = vrot.slane %v309, %v314
    %v333 = vunpack.c.l.b16 %v292
    %v334 = vunpack.c.l.b16 %v293
    %v335 = vunpack.c.l.b16 %v294
    %v336 = vunpack.c.l.b16 %v295
    %v337 = vunpack.c.l.b16 %v296
    %v338 = vunpack.c.l.b16 %v297
    %v339 = vunpack.c.l.b16 %v298
    %v340 = vunpack.c.l.b16 %v299
    %v341 = vunpack.c.l.b16 %v300
    %v342 = vunpack.c.l.b16 %v301
    %v343 = vunpack.c.l.b16 %v302
    %v344 = vunpack.c.l.b16 %v303
    %v345 = vunpack.c.l.b16 %v304
    %v346 = vunpack.c.l.b16 %v305
    %v347 = vunpack.c.l.b16 %v306
    %v348 = vunpack.c.l.b16 %v307
    %v349 = vpack.c.b16 %v334, %v333
    %v350 = vpack.c.b16 %v336, %v335
    %v351 = vpack.c.b16 %v338, %v337
    %v352 = vpack.c.b16 %v340, %v339
    %v353 = vpack.c.b16 %v342, %v341
    %v354 = vpack.c.b16 %v344, %v343
    %v355 = vpack.c.b16 %v346, %v345
    %v356 = vpack.c.b16 %v348, %v347
    %365 = vmatprep.subr.bf16.mxu0 0
    %366 = vmatpush1.bf16.msra.mxu0 %v349
    %367 = vmatprep.subr.bf16.mxu0 0
    %368 = vmatpush1.bf16.msra.mxu0 %v350
    %369 = vmatprep.subr.bf16.mxu0 0
    %370 = vmatpush1.bf16.msra.mxu0 %v351
    %371 = vmatprep.subr.bf16.mxu0 0
    %372 = vmatpush1.bf16.msra.mxu0 %v352
    %373 = vmatprep.subr.bf16.mxu0 0
    %374 = vmatpush1.bf16.msra.mxu0 %v353
    %375 = vmatprep.subr.bf16.mxu0 0
    %376 = vmatpush1.bf16.msra.mxu0 %v354
    %377 = vmatprep.subr.bf16.mxu0 0
    %378 = vmatpush1.bf16.msra.mxu0 %v355
    %379 = vmatprep.subr.bf16.mxu0 0
    %380 = vmatpush1.bf16.msra.mxu0 %v356
    %381 = vmatprep.subr.bf16.mxu0 0
    %382 = vmatpush1.bf16.msra.mxu0 0
    %383 = vmatprep.subr.bf16.mxu0 0
    %384 = vmatpush1.bf16.msra.mxu0 0
    %385 = vmatprep.subr.bf16.mxu0 0
    %386 = vmatpush1.bf16.msra.mxu0 0
    %387 = vmatprep.subr.bf16.mxu0 0
    %388 = vmatpush1.bf16.msra.mxu0 0
    %389 = vmatprep.subr.bf16.mxu0 0
    %390 = vmatpush1.bf16.msra.mxu0 0
    %391 = vmatprep.subr.bf16.mxu0 0
    %392 = vmatpush1.bf16.msra.mxu0 0
    %393 = vmatprep.subr.bf16.mxu0 0
    %394 = vmatpush1.bf16.msra.mxu0 0
    %395 = vmatprep.subr.bf16.mxu0 0
    %396 = vmatpush1.bf16.msra.mxu0 0
    %397 = vmatprep.mubr.bf16.mxu0 0
    %398 = vmatmul.mubr.bf16.gmra.mrb[0].mxu0 %v310
    %v399 = vpop.f32.mrb[0].mxu0
    %v400 = vadd.f32 %v315, %v399
    %v401 = vpop.f32.mrb[0].mxu0
    %v402 = vpop.f32.mrb[0].mxu0
    %v403 = vpop.f32.mrb[0].mxu0
    %404 = vdwg.mxu0
    %v405 = vmax.f32 %v400, 0.0
    %s406 = scalar_lea.vmem [#allocation5], 192
    %v407 = vld [vmem:[%s406] sm:$0xf]
    %v408 = vld [vmem:[%s406 + $0x4] sm:$0xf]
    %v409 = vld [vmem:[%s406 + $0x8] sm:$0xf]
    %v410 = vld [vmem:[%s406 + $0xc] sm:$0xf]
    %v411 = vld [vmem:[%s406 + $0x10] sm:$0xf]
    %v412 = vld [vmem:[%s406 + $0x14] sm:$0xf]
    %v413 = vld [vmem:[%s406 + $0x18] sm:$0xf]
    %v414 = vld [vmem:[%s406 + $0x1c] sm:$0xf]
    %v415 = vld [vmem:[%s406 + $0x20] sm:$0xf]
    %v416 = vld [vmem:[%s406 + $0x24] sm:$0xf]
    %v417 = vld [vmem:[%s406 + $0x28] sm:$0xf]
    %v418 = vld [vmem:[%s406 + $0x2c] sm:$0xf]
    %v419 = vld [vmem:[%s406 + $0x30] sm:$0xf]
    %v420 = vld [vmem:[%s406 + $0x34] sm:$0xf]
    %v421 = vld [vmem:[%s406 + $0x38] sm:$0xf]
    %v422 = vld [vmem:[%s406 + $0x3c] sm:$0xf]
    %s423 = scalar_lea.vmem [#allocation7], 3
    %v424 = vld [vmem:[%s423] sm:$0x1]
    %v425 = vpack.c.bf16 %v405, %v405
    %v427 = vlaneseq
    %v428 = vshrl.u32 %v427, 7
    %v429 = vsub.s32 0, %v428
    %v430 = vrot.slane %v424, %v429
    %v448 = vunpack.c.l.b16 %v407
    %v449 = vunpack.c.l.b16 %v408
    %v450 = vunpack.c.l.b16 %v409
    %v451 = vunpack.c.l.b16 %v410
    %v452 = vunpack.c.l.b16 %v411
    %v453 = vunpack.c.l.b16 %v412
    %v454 = vunpack.c.l.b16 %v413
    %v455 = vunpack.c.l.b16 %v414
    %v456 = vunpack.c.l.b16 %v415
    %v457 = vunpack.c.l.b16 %v416
    %v458 = vunpack.c.l.b16 %v417
    %v459 = vunpack.c.l.b16 %v418
    %v460 = vunpack.c.l.b16 %v419
    %v461 = vunpack.c.l.b16 %v420
    %v462 = vunpack.c.l.b16 %v421
    %v463 = vunpack.c.l.b16 %v422
    %v464 = vpack.c.b16 %v449, %v448
    %v465 = vpack.c.b16 %v451, %v450
    %v466 = vpack.c.b16 %v453, %v452
    %v467 = vpack.c.b16 %v455, %v454
    %v468 = vpack.c.b16 %v457, %v456
    %v469 = vpack.c.b16 %v459, %v458
    %v470 = vpack.c.b16 %v461, %v460
    %v471 = vpack.c.b16 %v463, %v462
    %480 = vmatprep.subr.bf16.mxu0 0
    %481 = vmatpush1.bf16.msra.mxu0 %v464
    %482 = vmatprep.subr.bf16.mxu0 0
    %483 = vmatpush1.bf16.msra.mxu0 %v465
    %484 = vmatprep.subr.bf16.mxu0 0
    %485 = vmatpush1.bf16.msra.mxu0 %v466
    %486 = vmatprep.subr.bf16.mxu0 0
    %487 = vmatpush1.bf16.msra.mxu0 %v467
    %488 = vmatprep.subr.bf16.mxu0 0
    %489 = vmatpush1.bf16.msra.mxu0 %v468
    %490 = vmatprep.subr.bf16.mxu0 0
    %491 = vmatpush1.bf16.msra.mxu0 %v469
    %492 = vmatprep.subr.bf16.mxu0 0
    %493 = vmatpush1.bf16.msra.mxu0 %v470
    %494 = vmatprep.subr.bf16.mxu0 0
    %495 = vmatpush1.bf16.msra.mxu0 %v471
    %496 = vmatprep.subr.bf16.mxu0 0
    %497 = vmatpush1.bf16.msra.mxu0 0
    %498 = vmatprep.subr.bf16.mxu0 0
    %499 = vmatpush1.bf16.msra.mxu0 0
    %500 = vmatprep.subr.bf16.mxu0 0
    %501 = vmatpush1.bf16.msra.mxu0 0
    %502 = vmatprep.subr.bf16.mxu0 0
    %503 = vmatpush1.bf16.msra.mxu0 0
    %504 = vmatprep.subr.bf16.mxu0 0
    %505 = vmatpush1.bf16.msra.mxu0 0
    %506 = vmatprep.subr.bf16.mxu0 0
    %507 = vmatpush1.bf16.msra.mxu0 0
    %508 = vmatprep.subr.bf16.mxu0 0
    %509 = vmatpush1.bf16.msra.mxu0 0
    %510 = vmatprep.subr.bf16.mxu0 0
    %511 = vmatpush1.bf16.msra.mxu0 0
    %512 = vmatprep.mubr.bf16.mxu0 0
    %513 = vmatmul.mubr.bf16.gmra.mrb[0].mxu0 %v425
    %v514 = vpop.f32.mrb[0].mxu0
    %v515 = vadd.f32 %v430, %v514
    %v516 = vpop.f32.mrb[0].mxu0
    %v517 = vpop.f32.mrb[0].mxu0
    %v518 = vpop.f32.mrb[0].mxu0
    %519 = vdwg.mxu0
    %v520 = vmax.f32 %v515, 0.0
    %s521 = scalar_lea.vmem [#allocation5], 256
    %v522 = vld [vmem:[%s521] sm:$0xf]
    %v523 = vld [vmem:[%s521 + $0x4] sm:$0xf]
    %v524 = vld [vmem:[%s521 + $0x8] sm:$0xf]
    %v525 = vld [vmem:[%s521 + $0xc] sm:$0xf]
    %v526 = vld [vmem:[%s521 + $0x10] sm:$0xf]
    %v527 = vld [vmem:[%s521 + $0x14] sm:$0xf]
    %v528 = vld [vmem:[%s521 + $0x18] sm:$0xf]
    %v529 = vld [vmem:[%s521 + $0x1c] sm:$0xf]
    %v530 = vld [vmem:[%s521 + $0x20] sm:$0xf]
    %v531 = vld [vmem:[%s521 + $0x24] sm:$0xf]
    %v532 = vld [vmem:[%s521 + $0x28] sm:$0xf]
    %v533 = vld [vmem:[%s521 + $0x2c] sm:$0xf]
    %v534 = vld [vmem:[%s521 + $0x30] sm:$0xf]
    %v535 = vld [vmem:[%s521 + $0x34] sm:$0xf]
    %v536 = vld [vmem:[%s521 + $0x38] sm:$0xf]
    %v537 = vld [vmem:[%s521 + $0x3c] sm:$0xf]
    %s538 = scalar_lea.vmem [#allocation7], 4
    %v539 = vld [vmem:[%s538] sm:$0x1]
    %v540 = vpack.c.bf16 %v520, %v520
    %v542 = vlaneseq
    %v543 = vshrl.u32 %v542, 7
    %v544 = vsub.s32 0, %v543
    %v545 = vrot.slane %v539, %v544
    %v563 = vunpack.c.l.b16 %v522
    %v564 = vunpack.c.l.b16 %v523
    %v565 = vunpack.c.l.b16 %v524
    %v566 = vunpack.c.l.b16 %v525
    %v567 = vunpack.c.l.b16 %v526
    %v568 = vunpack.c.l.b16 %v527
    %v569 = vunpack.c.l.b16 %v528
    %v570 = vunpack.c.l.b16 %v529
    %v571 = vunpack.c.l.b16 %v530
    %v572 = vunpack.c.l.b16 %v531
    %v573 = vunpack.c.l.b16 %v532
    %v574 = vunpack.c.l.b16 %v533
    %v575 = vunpack.c.l.b16 %v534
    %v576 = vunpack.c.l.b16 %v535
    %v577 = vunpack.c.l.b16 %v536
    %v578 = vunpack.c.l.b16 %v537
    %v579 = vpack.c.b16 %v564, %v563
    %v580 = vpack.c.b16 %v566, %v565
    %v581 = vpack.c.b16 %v568, %v567
    %v582 = vpack.c.b16 %v570, %v569
    %v583 = vpack.c.b16 %v572, %v571
    %v584 = vpack.c.b16 %v574, %v573
    %v585 = vpack.c.b16 %v576, %v575
    %v586 = vpack.c.b16 %v578, %v577
    %595 = vmatprep.subr.bf16.mxu0 0
    %596 = vmatpush1.bf16.msra.mxu0 %v579
    %597 = vmatprep.subr.bf16.mxu0 0
    %598 = vmatpush1.bf16.msra.mxu0 %v580
    %599 = vmatprep.subr.bf16.mxu0 0
    %600 = vmatpush1.bf16.msra.mxu0 %v581
    %601 = vmatprep.subr.bf16.mxu0 0
    %602 = vmatpush1.bf16.msra.mxu0 %v582
    %603 = vmatprep.subr.bf16.mxu0 0
    %604 = vmatpush1.bf16.msra.mxu0 %v583
    %605 = vmatprep.subr.bf16.mxu0 0
    %606 = vmatpush1.bf16.msra.mxu0 %v584
    %607 = vmatprep.subr.bf16.mxu0 0
    %608 = vmatpush1.bf16.msra.mxu0 %v585
    %609 = vmatprep.subr.bf16.mxu0 0
    %610 = vmatpush1.bf16.msra.mxu0 %v586
    %611 = vmatprep.subr.bf16.mxu0 0
    %612 = vmatpush1.bf16.msra.mxu0 0
    %613 = vmatprep.subr.bf16.mxu0 0
    %614 = vmatpush1.bf16.msra.mxu0 0
    %615 = vmatprep.subr.bf16.mxu0 0
    %616 = vmatpush1.bf16.msra.mxu0 0
    %617 = vmatprep.subr.bf16.mxu0 0
    %618 = vmatpush1.bf16.msra.mxu0 0
    %619 = vmatprep.subr.bf16.mxu0 0
    %620 = vmatpush1.bf16.msra.mxu0 0
    %621 = vmatprep.subr.bf16.mxu0 0
    %622 = vmatpush1.bf16.msra.mxu0 0
    %623 = vmatprep.subr.bf16.mxu0 0
    %624 = vmatpush1.bf16.msra.mxu0 0
    %625 = vmatprep.subr.bf16.mxu0 0
    %626 = vmatpush1.bf16.msra.mxu0 0
    %627 = vmatprep.mubr.bf16.mxu0 0
    %628 = vmatmul.mubr.bf16.gmra.mrb[0].mxu0 %v540
    %v629 = vpop.f32.mrb[0].mxu0
    %v630 = vadd.f32 %v545, %v629
    %v631 = vpop.f32.mrb[0].mxu0
    %v632 = vpop.f32.mrb[0].mxu0
    %v633 = vpop.f32.mrb[0].mxu0
    %634 = vdwg.mxu0
    %v635 = vmax.f32 %v630, 0.0
    %s636 = scalar_lea.vmem [#allocation5], 320
    %v637 = vld [vmem:[%s636] sm:$0xf]
    %v638 = vld [vmem:[%s636 + $0x4] sm:$0xf]
    %v639 = vld [vmem:[%s636 + $0x8] sm:$0xf]
    %v640 = vld [vmem:[%s636 + $0xc] sm:$0xf]
    %v641 = vld [vmem:[%s636 + $0x10] sm:$0xf]
    %v642 = vld [vmem:[%s636 + $0x14] sm:$0xf]
    %v643 = vld [vmem:[%s636 + $0x18] sm:$0xf]
    %v644 = vld [vmem:[%s636 + $0x1c] sm:$0xf]
    %v645 = vld [vmem:[%s636 + $0x20] sm:$0xf]
    %v646 = vld [vmem:[%s636 + $0x24] sm:$0xf]
    %v647 = vld [vmem:[%s636 + $0x28] sm:$0xf]
    %v648 = vld [vmem:[%s636 + $0x2c] sm:$0xf]
    %v649 = vld [vmem:[%s636 + $0x30] sm:$0xf]
    %v650 = vld [vmem:[%s636 + $0x34] sm:$0xf]
    %v651 = vld [vmem:[%s636 + $0x38] sm:$0xf]
    %v652 = vld [vmem:[%s636 + $0x3c] sm:$0xf]
    %s653 = scalar_lea.vmem [#allocation7], 5
    %v654 = vld [vmem:[%s653] sm:$0x1]
    %v655 = vpack.c.bf16 %v635, %v635
    %v657 = vlaneseq
    %v658 = vshrl.u32 %v657, 7
    %v659 = vsub.s32 0, %v658
    %v660 = vrot.slane %v654, %v659
    %v678 = vunpack.c.l.b16 %v637
    %v679 = vunpack.c.l.b16 %v638
    %v680 = vunpack.c.l.b16 %v639
    %v681 = vunpack.c.l.b16 %v640
    %v682 = vunpack.c.l.b16 %v641
    %v683 = vunpack.c.l.b16 %v642
    %v684 = vunpack.c.l.b16 %v643
    %v685 = vunpack.c.l.b16 %v644
    %v686 = vunpack.c.l.b16 %v645
    %v687 = vunpack.c.l.b16 %v646
    %v688 = vunpack.c.l.b16 %v647
    %v689 = vunpack.c.l.b16 %v648
    %v690 = vunpack.c.l.b16 %v649
    %v691 = vunpack.c.l.b16 %v650
    %v692 = vunpack.c.l.b16 %v651
    %v693 = vunpack.c.l.b16 %v652
    %v694 = vpack.c.b16 %v679, %v678
    %v695 = vpack.c.b16 %v681, %v680
    %v696 = vpack.c.b16 %v683, %v682
    %v697 = vpack.c.b16 %v685, %v684
    %v698 = vpack.c.b16 %v687, %v686
    %v699 = vpack.c.b16 %v689, %v688
    %v700 = vpack.c.b16 %v691, %v690
    %v701 = vpack.c.b16 %v693, %v692
    %710 = vmatprep.subr.bf16.mxu0 0
    %711 = vmatpush1.bf16.msra.mxu0 %v694
    %712 = vmatprep.subr.bf16.mxu0 0
    %713 = vmatpush1.bf16.msra.mxu0 %v695
    %714 = vmatprep.subr.bf16.mxu0 0
    %715 = vmatpush1.bf16.msra.mxu0 %v696
    %716 = vmatprep.subr.bf16.mxu0 0
    %717 = vmatpush1.bf16.msra.mxu0 %v697
    %718 = vmatprep.subr.bf16.mxu0 0
    %719 = vmatpush1.bf16.msra.mxu0 %v698
    %720 = vmatprep.subr.bf16.mxu0 0
    %721 = vmatpush1.bf16.msra.mxu0 %v699
    %722 = vmatprep.subr.bf16.mxu0 0
    %723 = vmatpush1.bf16.msra.mxu0 %v700
    %724 = vmatprep.subr.bf16.mxu0 0
    %725 = vmatpush1.bf16.msra.mxu0 %v701
    %726 = vmatprep.subr.bf16.mxu0 0
    %727 = vmatpush1.bf16.msra.mxu0 0
    %728 = vmatprep.subr.bf16.mxu0 0
    %729 = vmatpush1.bf16.msra.mxu0 0
    %730 = vmatprep.subr.bf16.mxu0 0
    %731 = vmatpush1.bf16.msra.mxu0 0
    %732 = vmatprep.subr.bf16.mxu0 0
    %733 = vmatpush1.bf16.msra.mxu0 0
    %734 = vmatprep.subr.bf16.mxu0 0
    %735 = vmatpush1.bf16.msra.mxu0 0
    %736 = vmatprep.subr.bf16.mxu0 0
    %737 = vmatpush1.bf16.msra.mxu0 0
    %738 = vmatprep.subr.bf16.mxu0 0
    %739 = vmatpush1.bf16.msra.mxu0 0
    %740 = vmatprep.subr.bf16.mxu0 0
    %741 = vmatpush1.bf16.msra.mxu0 0
    %742 = vmatprep.mubr.bf16.mxu0 0
    %743 = vmatmul.mubr.bf16.gmra.mrb[0].mxu0 %v655
    %v744 = vpop.f32.mrb[0].mxu0
    %v745 = vadd.f32 %v660, %v744
    %v746 = vpop.f32.mrb[0].mxu0
    %v747 = vpop.f32.mrb[0].mxu0
    %v748 = vpop.f32.mrb[0].mxu0
    %749 = vdwg.mxu0
    %v750 = vmax.f32 %v745, 0.0
    %s751 = scalar_lea.vmem [#allocation5], 384
    %v752 = vld [vmem:[%s751] sm:$0xf]
    %v753 = vld [vmem:[%s751 + $0x4] sm:$0xf]
    %v754 = vld [vmem:[%s751 + $0x8] sm:$0xf]
    %v755 = vld [vmem:[%s751 + $0xc] sm:$0xf]
    %v756 = vld [vmem:[%s751 + $0x10] sm:$0xf]
    %v757 = vld [vmem:[%s751 + $0x14] sm:$0xf]
    %v758 = vld [vmem:[%s751 + $0x18] sm:$0xf]
    %v759 = vld [vmem:[%s751 + $0x1c] sm:$0xf]
    %v760 = vld [vmem:[%s751 + $0x20] sm:$0xf]
    %v761 = vld [vmem:[%s751 + $0x24] sm:$0xf]
    %v762 = vld [vmem:[%s751 + $0x28] sm:$0xf]
    %v763 = vld [vmem:[%s751 + $0x2c] sm:$0xf]
    %v764 = vld [vmem:[%s751 + $0x30] sm:$0xf]
    %v765 = vld [vmem:[%s751 + $0x34] sm:$0xf]
    %v766 = vld [vmem:[%s751 + $0x38] sm:$0xf]
    %v767 = vld [vmem:[%s751 + $0x3c] sm:$0xf]
    %s768 = scalar_lea.vmem [#allocation7], 6
    %v769 = vld [vmem:[%s768] sm:$0x1]
    %v770 = vpack.c.bf16 %v750, %v750
    %v772 = vlaneseq
    %v773 = vshrl.u32 %v772, 7
    %v774 = vsub.s32 0, %v773
    %v775 = vrot.slane %v769, %v774
    %v793 = vunpack.c.l.b16 %v752
    %v794 = vunpack.c.l.b16 %v753
    %v795 = vunpack.c.l.b16 %v754
    %v796 = vunpack.c.l.b16 %v755
    %v797 = vunpack.c.l.b16 %v756
    %v798 = vunpack.c.l.b16 %v757
    %v799 = vunpack.c.l.b16 %v758
    %v800 = vunpack.c.l.b16 %v759
    %v801 = vunpack.c.l.b16 %v760
    %v802 = vunpack.c.l.b16 %v761
    %v803 = vunpack.c.l.b16 %v762
    %v804 = vunpack.c.l.b16 %v763
    %v805 = vunpack.c.l.b16 %v764
    %v806 = vunpack.c.l.b16 %v765
    %v807 = vunpack.c.l.b16 %v766
    %v808 = vunpack.c.l.b16 %v767
    %v809 = vpack.c.b16 %v794, %v793
    %v810 = vpack.c.b16 %v796, %v795
    %v811 = vpack.c.b16 %v798, %v797
    %v812 = vpack.c.b16 %v800, %v799
    %v813 = vpack.c.b16 %v802, %v801
    %v814 = vpack.c.b16 %v804, %v803
    %v815 = vpack.c.b16 %v806, %v805
    %v816 = vpack.c.b16 %v808, %v807
    %825 = vmatprep.subr.bf16.mxu0 0
    %826 = vmatpush1.bf16.msra.mxu0 %v809
    %827 = vmatprep.subr.bf16.mxu0 0
    %828 = vmatpush1.bf16.msra.mxu0 %v810
    %829 = vmatprep.subr.bf16.mxu0 0
    %830 = vmatpush1.bf16.msra.mxu0 %v811
    %831 = vmatprep.subr.bf16.mxu0 0
    %832 = vmatpush1.bf16.msra.mxu0 %v812
    %833 = vmatprep.subr.bf16.mxu0 0
    %834 = vmatpush1.bf16.msra.mxu0 %v813
    %835 = vmatprep.subr.bf16.mxu0 0
    %836 = vmatpush1.bf16.msra.mxu0 %v814
    %837 = vmatprep.subr.bf16.mxu0 0
    %838 = vmatpush1.bf16.msra.mxu0 %v815
    %839 = vmatprep.subr.bf16.mxu0 0
    %840 = vmatpush1.bf16.msra.mxu0 %v816
    %841 = vmatprep.subr.bf16.mxu0 0
    %842 = vmatpush1.bf16.msra.mxu0 0
    %843 = vmatprep.subr.bf16.mxu0 0
    %844 = vmatpush1.bf16.msra.mxu0 0
    %845 = vmatprep.subr.bf16.mxu0 0
    %846 = vmatpush1.bf16.msra.mxu0 0
    %847 = vmatprep.subr.bf16.mxu0 0
    %848 = vmatpush1.bf16.msra.mxu0 0
    %849 = vmatprep.subr.bf16.mxu0 0
    %850 = vmatpush1.bf16.msra.mxu0 0
    %851 = vmatprep.subr.bf16.mxu0 0
    %852 = vmatpush1.bf16.msra.mxu0 0
    %853 = vmatprep.subr.bf16.mxu0 0
    %854 = vmatpush1.bf16.msra.mxu0 0
    %855 = vmatprep.subr.bf16.mxu0 0
    %856 = vmatpush1.bf16.msra.mxu0 0
    %857 = vmatprep.mubr.bf16.mxu0 0
    %858 = vmatmul.mubr.bf16.gmra.mrb[0].mxu0 %v770
    %v859 = vpop.f32.mrb[0].mxu0
    %v860 = vadd.f32 %v775, %v859
    %v861 = vpop.f32.mrb[0].mxu0
    %v862 = vpop.f32.mrb[0].mxu0
    %v863 = vpop.f32.mrb[0].mxu0
    %864 = vdwg.mxu0
    %v865 = vmax.f32 %v860, 0.0
    %s866 = scalar_lea.vmem [#allocation5], 448
    %v867 = vld [vmem:[%s866] sm:$0xf]
    %v868 = vld [vmem:[%s866 + $0x4] sm:$0xf]
    %v869 = vld [vmem:[%s866 + $0x8] sm:$0xf]
    %v870 = vld [vmem:[%s866 + $0xc] sm:$0xf]
    %v871 = vld [vmem:[%s866 + $0x10] sm:$0xf]
    %v872 = vld [vmem:[%s866 + $0x14] sm:$0xf]
    %v873 = vld [vmem:[%s866 + $0x18] sm:$0xf]
    %v874 = vld [vmem:[%s866 + $0x1c] sm:$0xf]
    %v875 = vld [vmem:[%s866 + $0x20] sm:$0xf]
    %v876 = vld [vmem:[%s866 + $0x24] sm:$0xf]
    %v877 = vld [vmem:[%s866 + $0x28] sm:$0xf]
    %v878 = vld [vmem:[%s866 + $0x2c] sm:$0xf]
    %v879 = vld [vmem:[%s866 + $0x30] sm:$0xf]
    %v880 = vld [vmem:[%s866 + $0x34] sm:$0xf]
    %v881 = vld [vmem:[%s866 + $0x38] sm:$0xf]
    %v882 = vld [vmem:[%s866 + $0x3c] sm:$0xf]
    %s883 = scalar_lea.vmem [#allocation7], 7
    %v884 = vld [vmem:[%s883] sm:$0x1]
    %v885 = vpack.c.bf16 %v865, %v865
    %v887 = vlaneseq
    %v888 = vshrl.u32 %v887, 7
    %v889 = vsub.s32 0, %v888
    %v890 = vrot.slane %v884, %v889
    %v908 = vunpack.c.l.b16 %v867
    %v909 = vunpack.c.l.b16 %v868
    %v910 = vunpack.c.l.b16 %v869
    %v911 = vunpack.c.l.b16 %v870
    %v912 = vunpack.c.l.b16 %v871
    %v913 = vunpack.c.l.b16 %v872
    %v914 = vunpack.c.l.b16 %v873
    %v915 = vunpack.c.l.b16 %v874
    %v916 = vunpack.c.l.b16 %v875
    %v917 = vunpack.c.l.b16 %v876
    %v918 = vunpack.c.l.b16 %v877
    %v919 = vunpack.c.l.b16 %v878
    %v920 = vunpack.c.l.b16 %v879
    %v921 = vunpack.c.l.b16 %v880
    %v922 = vunpack.c.l.b16 %v881
    %v923 = vunpack.c.l.b16 %v882
    %v924 = vpack.c.b16 %v909, %v908
    %v925 = vpack.c.b16 %v911, %v910
    %v926 = vpack.c.b16 %v913, %v912
    %v927 = vpack.c.b16 %v915, %v914
    %v928 = vpack.c.b16 %v917, %v916
    %v929 = vpack.c.b16 %v919, %v918
    %v930 = vpack.c.b16 %v921, %v920
    %v931 = vpack.c.b16 %v923, %v922
    %940 = vmatprep.subr.bf16.mxu0 0
    %941 = vmatpush1.bf16.msra.mxu0 %v924
    %942 = vmatprep.subr.bf16.mxu0 0
    %943 = vmatpush1.bf16.msra.mxu0 %v925
    %944 = vmatprep.subr.bf16.mxu0 0
    %945 = vmatpush1.bf16.msra.mxu0 %v926
    %946 = vmatprep.subr.bf16.mxu0 0
    %947 = vmatpush1.bf16.msra.mxu0 %v927
    %948 = vmatprep.subr.bf16.mxu0 0
    %949 = vmatpush1.bf16.msra.mxu0 %v928
    %950 = vmatprep.subr.bf16.mxu0 0
    %951 = vmatpush1.bf16.msra.mxu0 %v929
    %952 = vmatprep.subr.bf16.mxu0 0
    %953 = vmatpush1.bf16.msra.mxu0 %v930
    %954 = vmatprep.subr.bf16.mxu0 0
    %955 = vmatpush1.bf16.msra.mxu0 %v931
    %956 = vmatprep.subr.bf16.mxu0 0
    %957 = vmatpush1.bf16.msra.mxu0 0
    %958 = vmatprep.subr.bf16.mxu0 0
    %959 = vmatpush1.bf16.msra.mxu0 0
    %960 = vmatprep.subr.bf16.mxu0 0
    %961 = vmatpush1.bf16.msra.mxu0 0
    %962 = vmatprep.subr.bf16.mxu0 0
    %963 = vmatpush1.bf16.msra.mxu0 0
    %964 = vmatprep.subr.bf16.mxu0 0
    %965 = vmatpush1.bf16.msra.mxu0 0
    %966 = vmatprep.subr.bf16.mxu0 0
    %967 = vmatpush1.bf16.msra.mxu0 0
    %968 = vmatprep.subr.bf16.mxu0 0
    %969 = vmatpush1.bf16.msra.mxu0 0
    %970 = vmatprep.subr.bf16.mxu0 0
    %971 = vmatpush1.bf16.msra.mxu0 0
    %972 = vmatprep.mubr.bf16.mxu0 0
    %973 = vmatmul.mubr.bf16.gmra.mrb[0].mxu0 %v885
    %v974 = vpop.f32.mrb[0].mxu0
    %v975 = vadd.f32 %v890, %v974
    %v976 = vpop.f32.mrb[0].mxu0
    %v977 = vpop.f32.mrb[0].mxu0
    %v978 = vpop.f32.mrb[0].mxu0
    %979 = vdwg.mxu0
    %980 = vst [vmem:[#allocation8] sm:$0xff] %v975
    // Predicated region
    $region26: #{tpu_custom_call.1} parent=1 // pred_check
      _
    $region27: #{tpu_custom_call.1} parent=1 // pred_check_branch
      %982 = sbr.rel (0) target = $region29
    $region28: #{tpu_custom_call.1} parent=1 // pred_region
      %s984 = ssub.s32 128, 128
      %985 = vsyncadd [#allocation4], %s984
      %s987 = sshll.u32 [#allocation8], 4
      %s988 = int_to_ptr.vmem [resolvable:$true] %s987
      %990 = dma.vmem_to_hbm [thread:$0]  %s988, 128, %s3, [#allocation4]
    $region29: #{tpu_custom_call.1} parent=1 // pred_fallthru
      _
    // Predicated region
    $region30: #{tpu_custom_call.1} parent=1 // pred_check
      _
    $region31: #{tpu_custom_call.1} parent=1 // pred_check_branch
      %992 = sbr.rel (0) target = $region33
    $region32: #{tpu_custom_call.1} parent=1 // pred_region
      %993 = dma.done [#allocation4], 128
    $region33: #{tpu_custom_call.1} parent=1 // pred_fallthru
      _
    %994 = vsyncpa [#allocation3], 1
    %995 = vsyncpa [#allocation6], 1
    %996 = vsyncpa [#allocation4], 1

// kernel: tpu_custom_call.1
$region0: #{tpu_custom_call.1}
  #allocation0 [shape = 'u32[]', space=smem, size = 0x4, offset = 0x4, fixed_abs, tag = 'smem constant byte address 0x4 - core index']
  #allocation1 [shape = 'u32[144,128]{1,0:T(1,128)}', space=vmem, size = 0x12000, scoped, tag = 'internal scratch']
  %s0 = inlined_call_operand.hbm [shape: f32[8,128], index: 0, kind: input, shape index: {}]
  %s1 = inlined_call_operand.hbm [shape: bf16[8,128,128], index: 1, kind: input, shape index: {}]
  %s2 = inlined_call_operand.hbm [shape: f32[8,1,128], index: 2, kind: input, shape index: {}]
  %s3 = inlined_call_operand.hbm [shape: f32[8,128], index: 3, kind: output, shape index: {}]
  %s4 = sld [smem:[#allocation0]]
  $region34: #{tpu_custom_call.1} parent=0
    _
  %s6 = ssub.s32 1, %s4
  %s7 = scalar_select 0, %s6, %s4
  $region1: #{tpu_custom_call.1} parent=0
    #allocation2 [shape = 'u8[4096]{0}', space=vmem, size = 0x1000, scoped, tag = 'input window, operand 0, single buffered']
    #allocation3 [shape = 's32[1]{0}', space=sflag, size = 0x4, scoped, tag = 'scoped memory for tpu_custom_call.1']
    #allocation4 [shape = 's32[1]{0}', space=sflag, size = 0x4, scoped, tag = 'scoped memory for tpu_custom_call.1']
    #allocation5 [shape = 'u8[262144]{0}', space=vmem, size = 0x40000, scoped, tag = 'input window, operand 1, single buffered']
    #allocation6 [shape = 's32[1]{0}', space=sflag, size = 0x4, scoped, tag = 'scoped memory for tpu_custom_call.1']
    #allocation7 [shape = 'u8[4096]{0}', space=vmem, size = 0x1000, scoped, tag = 'input window, operand 2, single buffered']
    #allocation8 [shape = 'u8[4096]{0}', space=vmem, size = 0x1000, scoped, tag = 'output window, operand 0, single buffered']
    %8 = vsyncpa [#allocation3], 0
    %9 = vsyncpa [#allocation6], 0
    %10 = vsyncpa [#allocation4], 0
    // Predicated region
    $region2: #{tpu_custom_call.1} parent=1 // pred_check
      _
    $region3: #{tpu_custom_call.1} parent=1 // pred_check_branch
      %12 = sbr.rel (0) target = $region5
    $region4: #{tpu_custom_call.1} parent=1 // pred_region
      %s14 = ssub.s32 128, 128
      %15 = vsyncadd [#allocation3], %s14
      %s17 = sshll.u32 [#allocation2], 4
      %s18 = int_to_ptr.vmem [resolvable:$true] %s17
      %20 = dma.hbm_to_vmem [thread:$0]  %s0, 128, %s18, [#allocation3]
    $region5: #{tpu_custom_call.1} parent=1 // pred_fallthru
      _
    // Predicated region
    $region6: #{tpu_custom_call.1} parent=1 // pred_check
      _
    $region7: #{tpu_custom_call.1} parent=1 // pred_check_branch
      %22 = sbr.rel (0) target = $region9
    $region8: #{tpu_custom_call.1} parent=1 // pred_region
      %s24 = ssub.s32 8192, 8192
      %25 = vsyncadd [#allocation6], %s24
      %s26 = sshll.u32 [#allocation5], 4
      %s27 = int_to_ptr.vmem [resolvable:$true] %s26
      %32 = dma.hbm_to_vmem [thread:$0]  %s1, 8192, %s27, [#allocation6], 64, 64, 4
    $region9: #{tpu_custom_call.1} parent=1 // pred_fallthru
      _
    // Predicated region
    $region10: #{tpu_custom_call.1} parent=1 // pred_check
      _
    $region11: #{tpu_custom_call.1} parent=1 // pred_check_branch
      %34 = sbr.rel (0) target = $region13
    $region12: #{tpu_custom_call.1} parent=1 // pred_region
      %s36 = ssub.s32 128, 128
      %37 = vsyncadd [#allocation6], %s36
      %s38 = sshll.u32 [#allocation7], 4
      %s39 = int_to_ptr.vmem [resolvable:$true] %s38
      %44 = dma.hbm_to_vmem [thread:$0]  %s2, 128, %s39, [#allocation6], 16, 16, 1
    $region13: #{tpu_custom_call.1} parent=1 // pred_fallthru
      _
    // Predicated region
    $region14: #{tpu_custom_call.1} parent=1 // pred_check
      _
    $region15: #{tpu_custom_call.1} parent=1 // pred_check_branch
      %46 = sbr.rel (0) target = $region17
    $region16: #{tpu_custom_call.1} parent=1 // pred_region
      %47 = dma.done [#allocation3], 128
    $region17: #{tpu_custom_call.1} parent=1 // pred_fallthru
      _
    // Predicated region
    $region18: #{tpu_custom_call.1} parent=1 // pred_check
      _
    $region19: #{tpu_custom_call.1} parent=1 // pred_check_branch
      %49 = sbr.rel (0) target = $region21
    $region20: #{tpu_custom_call.1} parent=1 // pred_region
      %50 = dma.done [#allocation6], 8192
    $region21: #{tpu_custom_call.1} parent=1 // pred_fallthru
      _
    // Predicated region
    $region22: #{tpu_custom_call.1} parent=1 // pred_check
      _
    $region23: #{tpu_custom_call.1} parent=1 // pred_check_branch
      %52 = sbr.rel (0) target = $region25
    $region24: #{tpu_custom_call.1} parent=1 // pred_region
      %53 = dma.done [#allocation6], 128
    $region25: #{tpu_custom_call.1} parent=1 // pred_fallthru
      _
    %v55 = vld [vmem:[#allocation2] sm:$0xff]
    %v56 = vmul.f32 %v55, %v55
    %57 = vadd.xlane.f32.xlu0 %v56
    %v58 = vpop.xlane.xlu0 %57
    %v59 = vmul.f32 %v58, 0.03125
    %v60 = vadd.f32 %v59, 1e-08
    %v61 = vrsqrt.pop %v60
    %v62 = vmul.f32 %v55, %v61
    %v63 = vld [vmem:[#allocation5] sm:$0xf]
    %v64 = vld [vmem:[#allocation5 + $0x4] sm:$0xf]
    %v65 = vld [vmem:[#allocation5 + $0x8] sm:$0xf]
    %v66 = vld [vmem:[#allocation5 + $0xc] sm:$0xf]
    %v67 = vld [vmem:[#allocation5 + $0x10] sm:$0xf]
    %v68 = vld [vmem:[#allocation5 + $0x14] sm:$0xf]
    %v69 = vld [vmem:[#allocation5 + $0x18] sm:$0xf]
    %v70 = vld [vmem:[#allocation5 + $0x1c] sm:$0xf]
    %v71 = vld [vmem:[#allocation5 + $0x20] sm:$0xf]
    %v72 = vld [vmem:[#allocation5 + $0x24] sm:$0xf]
    %v73 = vld [vmem:[#allocation5 + $0x28] sm:$0xf]
    %v74 = vld [vmem:[#allocation5 + $0x2c] sm:$0xf]
    %v75 = vld [vmem:[#allocation5 + $0x30] sm:$0xf]
    %v76 = vld [vmem:[#allocation5 + $0x34] sm:$0xf]
    %v77 = vld [vmem:[#allocation5 + $0x38] sm:$0xf]
    %v78 = vld [vmem:[#allocation5 + $0x3c] sm:$0xf]
    %v79 = vld [vmem:[#allocation7] sm:$0x1]
    %v80 = vpack.c.bf16 %v62, %v62
    %v82 = vlaneseq
    %v83 = vshrl.u32 %v82, 7
    %v84 = vsub.s32 0, %v83
    %v85 = vrot.slane %v79, %v84
    %v103 = vunpack.c.l.b16 %v63
    %v104 = vunpack.c.l.b16 %v64
    %v105 = vunpack.c.l.b16 %v65
    %v106 = vunpack.c.l.b16 %v66
    %v107 = vunpack.c.l.b16 %v67
    %v108 = vunpack.c.l.b16 %v68
    %v109 = vunpack.c.l.b16 %v69
    %v110 = vunpack.c.l.b16 %v70
    %v111 = vunpack.c.l.b16 %v71
    %v112 = vunpack.c.l.b16 %v72
    %v113 = vunpack.c.l.b16 %v73
    %v114 = vunpack.c.l.b16 %v74
    %v115 = vunpack.c.l.b16 %v75
    %v116 = vunpack.c.l.b16 %v76
    %v117 = vunpack.c.l.b16 %v77
    %v118 = vunpack.c.l.b16 %v78
    %v119 = vpack.c.b16 %v104, %v103
    %v120 = vpack.c.b16 %v106, %v105
    %v121 = vpack.c.b16 %v108, %v107
    %v122 = vpack.c.b16 %v110, %v109
    %v123 = vpack.c.b16 %v112, %v111
    %v124 = vpack.c.b16 %v114, %v113
    %v125 = vpack.c.b16 %v116, %v115
    %v126 = vpack.c.b16 %v118, %v117
    %135 = vmatprep.subr.bf16.mxu0 0
    %136 = vmatpush1.bf16.msra.mxu0 %v119
    %137 = vmatprep.subr.bf16.mxu0 0
    %138 = vmatpush1.bf16.msra.mxu0 %v120
    %139 = vmatprep.subr.bf16.mxu0 0
    %140 = vmatpush1.bf16.msra.mxu0 %v121
    %141 = vmatprep.subr.bf16.mxu0 0
    %142 = vmatpush1.bf16.msra.mxu0 %v122
    %143 = vmatprep.subr.bf16.mxu0 0
    %144 = vmatpush1.bf16.msra.mxu0 %v123
    %145 = vmatprep.subr.bf16.mxu0 0
    %146 = vmatpush1.bf16.msra.mxu0 %v124
    %147 = vmatprep.subr.bf16.mxu0 0
    %148 = vmatpush1.bf16.msra.mxu0 %v125
    %149 = vmatprep.subr.bf16.mxu0 0
    %150 = vmatpush1.bf16.msra.mxu0 %v126
    %151 = vmatprep.subr.bf16.mxu0 0
    %152 = vmatpush1.bf16.msra.mxu0 0
    %153 = vmatprep.subr.bf16.mxu0 0
    %154 = vmatpush1.bf16.msra.mxu0 0
    %155 = vmatprep.subr.bf16.mxu0 0
    %156 = vmatpush1.bf16.msra.mxu0 0
    %157 = vmatprep.subr.bf16.mxu0 0
    %158 = vmatpush1.bf16.msra.mxu0 0
    %159 = vmatprep.subr.bf16.mxu0 0
    %160 = vmatpush1.bf16.msra.mxu0 0
    %161 = vmatprep.subr.bf16.mxu0 0
    %162 = vmatpush1.bf16.msra.mxu0 0
    %163 = vmatprep.subr.bf16.mxu0 0
    %164 = vmatpush1.bf16.msra.mxu0 0
    %165 = vmatprep.subr.bf16.mxu0 0
    %166 = vmatpush1.bf16.msra.mxu0 0
    %167 = vmatprep.mubr.bf16.mxu0 0
    %168 = vmatmul.mubr.bf16.gmra.mrb[0].mxu0 %v80
    %v169 = vpop.f32.mrb[0].mxu0
    %v170 = vadd.f32 %v85, %v169
    %v171 = vpop.f32.mrb[0].mxu0
    %v172 = vpop.f32.mrb[0].mxu0
    %v173 = vpop.f32.mrb[0].mxu0
    %174 = vdwg.mxu0
    %v175 = vmax.f32 %v170, 0.0
    %s176 = scalar_lea.vmem [#allocation5], 64
    %v177 = vld [vmem:[%s176] sm:$0xf]
    %v178 = vld [vmem:[%s176 + $0x4] sm:$0xf]
    %v179 = vld [vmem:[%s176 + $0x8] sm:$0xf]
    %v180 = vld [vmem:[%s176 + $0xc] sm:$0xf]
    %v181 = vld [vmem:[%s176 + $0x10] sm:$0xf]
    %v182 = vld [vmem:[%s176 + $0x14] sm:$0xf]
    %v183 = vld [vmem:[%s176 + $0x18] sm:$0xf]
    %v184 = vld [vmem:[%s176 + $0x1c] sm:$0xf]
    %v185 = vld [vmem:[%s176 + $0x20] sm:$0xf]
    %v186 = vld [vmem:[%s176 + $0x24] sm:$0xf]
    %v187 = vld [vmem:[%s176 + $0x28] sm:$0xf]
    %v188 = vld [vmem:[%s176 + $0x2c] sm:$0xf]
    %v189 = vld [vmem:[%s176 + $0x30] sm:$0xf]
    %v190 = vld [vmem:[%s176 + $0x34] sm:$0xf]
    %v191 = vld [vmem:[%s176 + $0x38] sm:$0xf]
    %v192 = vld [vmem:[%s176 + $0x3c] sm:$0xf]
    %s193 = scalar_lea.vmem [#allocation7], 1
    %v194 = vld [vmem:[%s193] sm:$0x1]
    %v195 = vpack.c.bf16 %v175, %v175
    %v197 = vlaneseq
    %v198 = vshrl.u32 %v197, 7
    %v199 = vsub.s32 0, %v198
    %v200 = vrot.slane %v194, %v199
    %v218 = vunpack.c.l.b16 %v177
    %v219 = vunpack.c.l.b16 %v178
    %v220 = vunpack.c.l.b16 %v179
    %v221 = vunpack.c.l.b16 %v180
    %v222 = vunpack.c.l.b16 %v181
    %v223 = vunpack.c.l.b16 %v182
    %v224 = vunpack.c.l.b16 %v183
    %v225 = vunpack.c.l.b16 %v184
    %v226 = vunpack.c.l.b16 %v185
    %v227 = vunpack.c.l.b16 %v186
    %v228 = vunpack.c.l.b16 %v187
    %v229 = vunpack.c.l.b16 %v188
    %v230 = vunpack.c.l.b16 %v189
    %v231 = vunpack.c.l.b16 %v190
    %v232 = vunpack.c.l.b16 %v191
    %v233 = vunpack.c.l.b16 %v192
    %v234 = vpack.c.b16 %v219, %v218
    %v235 = vpack.c.b16 %v221, %v220
    %v236 = vpack.c.b16 %v223, %v222
    %v237 = vpack.c.b16 %v225, %v224
    %v238 = vpack.c.b16 %v227, %v226
    %v239 = vpack.c.b16 %v229, %v228
    %v240 = vpack.c.b16 %v231, %v230
    %v241 = vpack.c.b16 %v233, %v232
    %250 = vmatprep.subr.bf16.mxu0 0
    %251 = vmatpush1.bf16.msra.mxu0 %v234
    %252 = vmatprep.subr.bf16.mxu0 0
    %253 = vmatpush1.bf16.msra.mxu0 %v235
    %254 = vmatprep.subr.bf16.mxu0 0
    %255 = vmatpush1.bf16.msra.mxu0 %v236
    %256 = vmatprep.subr.bf16.mxu0 0
    %257 = vmatpush1.bf16.msra.mxu0 %v237
    %258 = vmatprep.subr.bf16.mxu0 0
    %259 = vmatpush1.bf16.msra.mxu0 %v238
    %260 = vmatprep.subr.bf16.mxu0 0
    %261 = vmatpush1.bf16.msra.mxu0 %v239
    %262 = vmatprep.subr.bf16.mxu0 0
    %263 = vmatpush1.bf16.msra.mxu0 %v240
    %264 = vmatprep.subr.bf16.mxu0 0
    %265 = vmatpush1.bf16.msra.mxu0 %v241
    %266 = vmatprep.subr.bf16.mxu0 0
    %267 = vmatpush1.bf16.msra.mxu0 0
    %268 = vmatprep.subr.bf16.mxu0 0
    %269 = vmatpush1.bf16.msra.mxu0 0
    %270 = vmatprep.subr.bf16.mxu0 0
    %271 = vmatpush1.bf16.msra.mxu0 0
    %272 = vmatprep.subr.bf16.mxu0 0
    %273 = vmatpush1.bf16.msra.mxu0 0
    %274 = vmatprep.subr.bf16.mxu0 0
    %275 = vmatpush1.bf16.msra.mxu0 0
    %276 = vmatprep.subr.bf16.mxu0 0
    %277 = vmatpush1.bf16.msra.mxu0 0
    %278 = vmatprep.subr.bf16.mxu0 0
    %279 = vmatpush1.bf16.msra.mxu0 0
    %280 = vmatprep.subr.bf16.mxu0 0
    %281 = vmatpush1.bf16.msra.mxu0 0
    %282 = vmatprep.mubr.bf16.mxu0 0
    %283 = vmatmul.mubr.bf16.gmra.mrb[0].mxu0 %v195
    %v284 = vpop.f32.mrb[0].mxu0
    %v285 = vadd.f32 %v200, %v284
    %v286 = vpop.f32.mrb[0].mxu0
    %v287 = vpop.f32.mrb[0].mxu0
    %v288 = vpop.f32.mrb[0].mxu0
    %289 = vdwg.mxu0
    %v290 = vmax.f32 %v285, 0.0
    %s291 = scalar_lea.vmem [#allocation5], 128
    %v292 = vld [vmem:[%s291] sm:$0xf]
    %v293 = vld [vmem:[%s291 + $0x4] sm:$0xf]
    %v294 = vld [vmem:[%s291 + $0x8] sm:$0xf]
    %v295 = vld [vmem:[%s291 + $0xc] sm:$0xf]
    %v296 = vld [vmem:[%s291 + $0x10] sm:$0xf]
    %v297 = vld [vmem:[%s291 + $0x14] sm:$0xf]
    %v298 = vld [vmem:[%s291 + $0x18] sm:$0xf]
    %v299 = vld [vmem:[%s291 + $0x1c] sm:$0xf]
    %v300 = vld [vmem:[%s291 + $0x20] sm:$0xf]
    %v301 = vld [vmem:[%s291 + $0x24] sm:$0xf]
    %v302 = vld [vmem:[%s291 + $0x28] sm:$0xf]
    %v303 = vld [vmem:[%s291 + $0x2c] sm:$0xf]
    %v304 = vld [vmem:[%s291 + $0x30] sm:$0xf]
    %v305 = vld [vmem:[%s291 + $0x34] sm:$0xf]
    %v306 = vld [vmem:[%s291 + $0x38] sm:$0xf]
    %v307 = vld [vmem:[%s291 + $0x3c] sm:$0xf]
    %s308 = scalar_lea.vmem [#allocation7], 2
    %v309 = vld [vmem:[%s308] sm:$0x1]
    %v310 = vpack.c.bf16 %v290, %v290
    %v312 = vlaneseq
    %v313 = vshrl.u32 %v312, 7
    %v314 = vsub.s32 0, %v313
    %v315 = vrot.slane %v309, %v314
    %v333 = vunpack.c.l.b16 %v292
    %v334 = vunpack.c.l.b16 %v293
    %v335 = vunpack.c.l.b16 %v294
    %v336 = vunpack.c.l.b16 %v295
    %v337 = vunpack.c.l.b16 %v296
    %v338 = vunpack.c.l.b16 %v297
    %v339 = vunpack.c.l.b16 %v298
    %v340 = vunpack.c.l.b16 %v299
    %v341 = vunpack.c.l.b16 %v300
    %v342 = vunpack.c.l.b16 %v301
    %v343 = vunpack.c.l.b16 %v302
    %v344 = vunpack.c.l.b16 %v303
    %v345 = vunpack.c.l.b16 %v304
    %v346 = vunpack.c.l.b16 %v305
    %v347 = vunpack.c.l.b16 %v306
    %v348 = vunpack.c.l.b16 %v307
    %v349 = vpack.c.b16 %v334, %v333
    %v350 = vpack.c.b16 %v336, %v335
    %v351 = vpack.c.b16 %v338, %v337
    %v352 = vpack.c.b16 %v340, %v339
    %v353 = vpack.c.b16 %v342, %v341
    %v354 = vpack.c.b16 %v344, %v343
    %v355 = vpack.c.b16 %v346, %v345
    %v356 = vpack.c.b16 %v348, %v347
    %365 = vmatprep.subr.bf16.mxu0 0
    %366 = vmatpush1.bf16.msra.mxu0 %v349
    %367 = vmatprep.subr.bf16.mxu0 0
    %368 = vmatpush1.bf16.msra.mxu0 %v350
    %369 = vmatprep.subr.bf16.mxu0 0
    %370 = vmatpush1.bf16.msra.mxu0 %v351
    %371 = vmatprep.subr.bf16.mxu0 0
    %372 = vmatpush1.bf16.msra.mxu0 %v352
    %373 = vmatprep.subr.bf16.mxu0 0
    %374 = vmatpush1.bf16.msra.mxu0 %v353
    %375 = vmatprep.subr.bf16.mxu0 0
    %376 = vmatpush1.bf16.msra.mxu0 %v354
    %377 = vmatprep.subr.bf16.mxu0 0
    %378 = vmatpush1.bf16.msra.mxu0 %v355
    %379 = vmatprep.subr.bf16.mxu0 0
    %380 = vmatpush1.bf16.msra.mxu0 %v356
    %381 = vmatprep.subr.bf16.mxu0 0
    %382 = vmatpush1.bf16.msra.mxu0 0
    %383 = vmatprep.subr.bf16.mxu0 0
    %384 = vmatpush1.bf16.msra.mxu0 0
    %385 = vmatprep.subr.bf16.mxu0 0
    %386 = vmatpush1.bf16.msra.mxu0 0
    %387 = vmatprep.subr.bf16.mxu0 0
    %388 = vmatpush1.bf16.msra.mxu0 0
    %389 = vmatprep.subr.bf16.mxu0 0
    %390 = vmatpush1.bf16.msra.mxu0 0
    %391 = vmatprep.subr.bf16.mxu0 0
    %392 = vmatpush1.bf16.msra.mxu0 0
    %393 = vmatprep.subr.bf16.mxu0 0
    %394 = vmatpush1.bf16.msra.mxu0 0
    %395 = vmatprep.subr.bf16.mxu0 0
    %396 = vmatpush1.bf16.msra.mxu0 0
    %397 = vmatprep.mubr.bf16.mxu0 0
    %398 = vmatmul.mubr.bf16.gmra.mrb[0].mxu0 %v310
    %v399 = vpop.f32.mrb[0].mxu0
    %v400 = vadd.f32 %v315, %v399
    %v401 = vpop.f32.mrb[0].mxu0
    %v402 = vpop.f32.mrb[0].mxu0
    %v403 = vpop.f32.mrb[0].mxu0
    %404 = vdwg.mxu0
    %v405 = vmax.f32 %v400, 0.0
    %s406 = scalar_lea.vmem [#allocation5], 192
    %v407 = vld [vmem:[%s406] sm:$0xf]
    %v408 = vld [vmem:[%s406 + $0x4] sm:$0xf]
    %v409 = vld [vmem:[%s406 + $0x8] sm:$0xf]
    %v410 = vld [vmem:[%s406 + $0xc] sm:$0xf]
    %v411 = vld [vmem:[%s406 + $0x10] sm:$0xf]
    %v412 = vld [vmem:[%s406 + $0x14] sm:$0xf]
    %v413 = vld [vmem:[%s406 + $0x18] sm:$0xf]
    %v414 = vld [vmem:[%s406 + $0x1c] sm:$0xf]
    %v415 = vld [vmem:[%s406 + $0x20] sm:$0xf]
    %v416 = vld [vmem:[%s406 + $0x24] sm:$0xf]
    %v417 = vld [vmem:[%s406 + $0x28] sm:$0xf]
    %v418 = vld [vmem:[%s406 + $0x2c] sm:$0xf]
    %v419 = vld [vmem:[%s406 + $0x30] sm:$0xf]
    %v420 = vld [vmem:[%s406 + $0x34] sm:$0xf]
    %v421 = vld [vmem:[%s406 + $0x38] sm:$0xf]
    %v422 = vld [vmem:[%s406 + $0x3c] sm:$0xf]
    %s423 = scalar_lea.vmem [#allocation7], 3
    %v424 = vld [vmem:[%s423] sm:$0x1]
    %v425 = vpack.c.bf16 %v405, %v405
    %v427 = vlaneseq
    %v428 = vshrl.u32 %v427, 7
    %v429 = vsub.s32 0, %v428
    %v430 = vrot.slane %v424, %v429
    %v448 = vunpack.c.l.b16 %v407
    %v449 = vunpack.c.l.b16 %v408
    %v450 = vunpack.c.l.b16 %v409
    %v451 = vunpack.c.l.b16 %v410
    %v452 = vunpack.c.l.b16 %v411
    %v453 = vunpack.c.l.b16 %v412
    %v454 = vunpack.c.l.b16 %v413
    %v455 = vunpack.c.l.b16 %v414
    %v456 = vunpack.c.l.b16 %v415
    %v457 = vunpack.c.l.b16 %v416
    %v458 = vunpack.c.l.b16 %v417
    %v459 = vunpack.c.l.b16 %v418
    %v460 = vunpack.c.l.b16 %v419
    %v461 = vunpack.c.l.b16 %v420
    %v462 = vunpack.c.l.b16 %v421
    %v463 = vunpack.c.l.b16 %v422
    %v464 = vpack.c.b16 %v449, %v448
    %v465 = vpack.c.b16 %v451, %v450
    %v466 = vpack.c.b16 %v453, %v452
    %v467 = vpack.c.b16 %v455, %v454
    %v468 = vpack.c.b16 %v457, %v456
    %v469 = vpack.c.b16 %v459, %v458
    %v470 = vpack.c.b16 %v461, %v460
    %v471 = vpack.c.b16 %v463, %v462
    %480 = vmatprep.subr.bf16.mxu0 0
    %481 = vmatpush1.bf16.msra.mxu0 %v464
    %482 = vmatprep.subr.bf16.mxu0 0
    %483 = vmatpush1.bf16.msra.mxu0 %v465
    %484 = vmatprep.subr.bf16.mxu0 0
    %485 = vmatpush1.bf16.msra.mxu0 %v466
    %486 = vmatprep.subr.bf16.mxu0 0
    %487 = vmatpush1.bf16.msra.mxu0 %v467
    %488 = vmatprep.subr.bf16.mxu0 0
    %489 = vmatpush1.bf16.msra.mxu0 %v468
    %490 = vmatprep.subr.bf16.mxu0 0
    %491 = vmatpush1.bf16.msra.mxu0 %v469
    %492 = vmatprep.subr.bf16.mxu0 0
    %493 = vmatpush1.bf16.msra.mxu0 %v470
    %494 = vmatprep.subr.bf16.mxu0 0
    %495 = vmatpush1.bf16.msra.mxu0 %v471
    %496 = vmatprep.subr.bf16.mxu0 0
    %497 = vmatpush1.bf16.msra.mxu0 0
    %498 = vmatprep.subr.bf16.mxu0 0
    %499 = vmatpush1.bf16.msra.mxu0 0
    %500 = vmatprep.subr.bf16.mxu0 0
    %501 = vmatpush1.bf16.msra.mxu0 0
    %502 = vmatprep.subr.bf16.mxu0 0
    %503 = vmatpush1.bf16.msra.mxu0 0
    %504 = vmatprep.subr.bf16.mxu0 0
    %505 = vmatpush1.bf16.msra.mxu0 0
    %506 = vmatprep.subr.bf16.mxu0 0
    %507 = vmatpush1.bf16.msra.mxu0 0
    %508 = vmatprep.subr.bf16.mxu0 0
    %509 = vmatpush1.bf16.msra.mxu0 0
    %510 = vmatprep.subr.bf16.mxu0 0
    %511 = vmatpush1.bf16.msra.mxu0 0
    %512 = vmatprep.mubr.bf16.mxu0 0
    %513 = vmatmul.mubr.bf16.gmra.mrb[0].mxu0 %v425
    %v514 = vpop.f32.mrb[0].mxu0
    %v515 = vadd.f32 %v430, %v514
    %v516 = vpop.f32.mrb[0].mxu0
    %v517 = vpop.f32.mrb[0].mxu0
    %v518 = vpop.f32.mrb[0].mxu0
    %519 = vdwg.mxu0
    %v520 = vmax.f32 %v515, 0.0
    %s521 = scalar_lea.vmem [#allocation5], 256
    %v522 = vld [vmem:[%s521] sm:$0xf]
    %v523 = vld [vmem:[%s521 + $0x4] sm:$0xf]
    %v524 = vld [vmem:[%s521 + $0x8] sm:$0xf]
    %v525 = vld [vmem:[%s521 + $0xc] sm:$0xf]
    %v526 = vld [vmem:[%s521 + $0x10] sm:$0xf]
    %v527 = vld [vmem:[%s521 + $0x14] sm:$0xf]
    %v528 = vld [vmem:[%s521 + $0x18] sm:$0xf]
    %v529 = vld [vmem:[%s521 + $0x1c] sm:$0xf]
    %v530 = vld [vmem:[%s521 + $0x20] sm:$0xf]
    %v531 = vld [vmem:[%s521 + $0x24] sm:$0xf]
    %v532 = vld [vmem:[%s521 + $0x28] sm:$0xf]
    %v533 = vld [vmem:[%s521 + $0x2c] sm:$0xf]
    %v534 = vld [vmem:[%s521 + $0x30] sm:$0xf]
    %v535 = vld [vmem:[%s521 + $0x34] sm:$0xf]
    %v536 = vld [vmem:[%s521 + $0x38] sm:$0xf]
    %v537 = vld [vmem:[%s521 + $0x3c] sm:$0xf]
    %s538 = scalar_lea.vmem [#allocation7], 4
    %v539 = vld [vmem:[%s538] sm:$0x1]
    %v540 = vpack.c.bf16 %v520, %v520
    %v542 = vlaneseq
    %v543 = vshrl.u32 %v542, 7
    %v544 = vsub.s32 0, %v543
    %v545 = vrot.slane %v539, %v544
    %v563 = vunpack.c.l.b16 %v522
    %v564 = vunpack.c.l.b16 %v523
    %v565 = vunpack.c.l.b16 %v524
    %v566 = vunpack.c.l.b16 %v525
    %v567 = vunpack.c.l.b16 %v526
    %v568 = vunpack.c.l.b16 %v527
    %v569 = vunpack.c.l.b16 %v528
    %v570 = vunpack.c.l.b16 %v529
    %v571 = vunpack.c.l.b16 %v530
    %v572 = vunpack.c.l.b16 %v531
    %v573 = vunpack.c.l.b16 %v532
    %v574 = vunpack.c.l.b16 %v533
    %v575 = vunpack.c.l.b16 %v534
    %v576 = vunpack.c.l.b16 %v535
    %v577 = vunpack.c.l.b16 %v536
    %v578 = vunpack.c.l.b16 %v537
    %v579 = vpack.c.b16 %v564, %v563
    %v580 = vpack.c.b16 %v566, %v565
    %v581 = vpack.c.b16 %v568, %v567
    %v582 = vpack.c.b16 %v570, %v569
    %v583 = vpack.c.b16 %v572, %v571
    %v584 = vpack.c.b16 %v574, %v573
    %v585 = vpack.c.b16 %v576, %v575
    %v586 = vpack.c.b16 %v578, %v577
    %595 = vmatprep.subr.bf16.mxu0 0
    %596 = vmatpush1.bf16.msra.mxu0 %v579
    %597 = vmatprep.subr.bf16.mxu0 0
    %598 = vmatpush1.bf16.msra.mxu0 %v580
    %599 = vmatprep.subr.bf16.mxu0 0
    %600 = vmatpush1.bf16.msra.mxu0 %v581
    %601 = vmatprep.subr.bf16.mxu0 0
    %602 = vmatpush1.bf16.msra.mxu0 %v582
    %603 = vmatprep.subr.bf16.mxu0 0
    %604 = vmatpush1.bf16.msra.mxu0 %v583
    %605 = vmatprep.subr.bf16.mxu0 0
    %606 = vmatpush1.bf16.msra.mxu0 %v584
    %607 = vmatprep.subr.bf16.mxu0 0
    %608 = vmatpush1.bf16.msra.mxu0 %v585
    %609 = vmatprep.subr.bf16.mxu0 0
    %610 = vmatpush1.bf16.msra.mxu0 %v586
    %611 = vmatprep.subr.bf16.mxu0 0
    %612 = vmatpush1.bf16.msra.mxu0 0
    %613 = vmatprep.subr.bf16.mxu0 0
    %614 = vmatpush1.bf16.msra.mxu0 0
    %615 = vmatprep.subr.bf16.mxu0 0
    %616 = vmatpush1.bf16.msra.mxu0 0
    %617 = vmatprep.subr.bf16.mxu0 0
    %618 = vmatpush1.bf16.msra.mxu0 0
    %619 = vmatprep.subr.bf16.mxu0 0
    %620 = vmatpush1.bf16.msra.mxu0 0
    %621 = vmatprep.subr.bf16.mxu0 0
    %622 = vmatpush1.bf16.msra.mxu0 0
    %623 = vmatprep.subr.bf16.mxu0 0
    %624 = vmatpush1.bf16.msra.mxu0 0
    %625 = vmatprep.subr.bf16.mxu0 0
    %626 = vmatpush1.bf16.msra.mxu0 0
    %627 = vmatprep.mubr.bf16.mxu0 0
    %628 = vmatmul.mubr.bf16.gmra.mrb[0].mxu0 %v540
    %v629 = vpop.f32.mrb[0].mxu0
    %v630 = vadd.f32 %v545, %v629
    %v631 = vpop.f32.mrb[0].mxu0
    %v632 = vpop.f32.mrb[0].mxu0
    %v633 = vpop.f32.mrb[0].mxu0
    %634 = vdwg.mxu0
    %v635 = vmax.f32 %v630, 0.0
    %s636 = scalar_lea.vmem [#allocation5], 320
    %v637 = vld [vmem:[%s636] sm:$0xf]
    %v638 = vld [vmem:[%s636 + $0x4] sm:$0xf]
    %v639 = vld [vmem:[%s636 + $0x8] sm:$0xf]
    %v640 = vld [vmem:[%s636 + $0xc] sm:$0xf]
    %v641 = vld [vmem:[%s636 + $0x10] sm:$0xf]
    %v642 = vld [vmem:[%s636 + $0x14] sm:$0xf]
    %v643 = vld [vmem:[%s636 + $0x18] sm:$0xf]
    %v644 = vld [vmem:[%s636 + $0x1c] sm:$0xf]
    %v645 = vld [vmem:[%s636 + $0x20] sm:$0xf]
    %v646 = vld [vmem:[%s636 + $0x24] sm:$0xf]
    %v647 = vld [vmem:[%s636 + $0x28] sm:$0xf]
    %v648 = vld [vmem:[%s636 + $0x2c] sm:$0xf]
    %v649 = vld [vmem:[%s636 + $0x30] sm:$0xf]
    %v650 = vld [vmem:[%s636 + $0x34] sm:$0xf]
    %v651 = vld [vmem:[%s636 + $0x38] sm:$0xf]
    %v652 = vld [vmem:[%s636 + $0x3c] sm:$0xf]
    %s653 = scalar_lea.vmem [#allocation7], 5
    %v654 = vld [vmem:[%s653] sm:$0x1]
    %v655 = vpack.c.bf16 %v635, %v635
    %v657 = vlaneseq
    %v658 = vshrl.u32 %v657, 7
    %v659 = vsub.s32 0, %v658
    %v660 = vrot.slane %v654, %v659
    %v678 = vunpack.c.l.b16 %v637
    %v679 = vunpack.c.l.b16 %v638
    %v680 = vunpack.c.l.b16 %v639
    %v681 = vunpack.c.l.b16 %v640
    %v682 = vunpack.c.l.b16 %v641
    %v683 = vunpack.c.l.b16 %v642
    %v684 = vunpack.c.l.b16 %v643
    %v685 = vunpack.c.l.b16 %v644
    %v686 = vunpack.c.l.b16 %v645
    %v687 = vunpack.c.l.b16 %v646
    %v688 = vunpack.c.l.b16 %v647
    %v689 = vunpack.c.l.b16 %v648
    %v690 = vunpack.c.l.b16 %v649
    %v691 = vunpack.c.l.b16 %v650
    %v692 = vunpack.c.l.b16 %v651
    %v693 = vunpack.c.l.b16 %v652
    %v694 = vpack.c.b16 %v679, %v678
    %v695 = vpack.c.b16 %v681, %v680
    %v696 = vpack.c.b16 %v683, %v682
    %v697 = vpack.c.b16 %v685, %v684
    %v698 = vpack.c.b16 %v687, %v686
    %v699 = vpack.c.b16 %v689, %v688
    %v700 = vpack.c.b16 %v691, %v690
    %v701 = vpack.c.b16 %v693, %v692
    %710 = vmatprep.subr.bf16.mxu0 0
    %711 = vmatpush1.bf16.msra.mxu0 %v694
    %712 = vmatprep.subr.bf16.mxu0 0
    %713 = vmatpush1.bf16.msra.mxu0 %v695
    %714 = vmatprep.subr.bf16.mxu0 0
    %715 = vmatpush1.bf16.msra.mxu0 %v696
    %716 = vmatprep.subr.bf16.mxu0 0
    %717 = vmatpush1.bf16.msra.mxu0 %v697
    %718 = vmatprep.subr.bf16.mxu0 0
    %719 = vmatpush1.bf16.msra.mxu0 %v698
    %720 = vmatprep.subr.bf16.mxu0 0
    %721 = vmatpush1.bf16.msra.mxu0 %v699
    %722 = vmatprep.subr.bf16.mxu0 0
    %723 = vmatpush1.bf16.msra.mxu0 %v700
    %724 = vmatprep.subr.bf16.mxu0 0
    %725 = vmatpush1.bf16.msra.mxu0 %v701
    %726 = vmatprep.subr.bf16.mxu0 0
    %727 = vmatpush1.bf16.msra.mxu0 0
    %728 = vmatprep.subr.bf16.mxu0 0
    %729 = vmatpush1.bf16.msra.mxu0 0
    %730 = vmatprep.subr.bf16.mxu0 0
    %731 = vmatpush1.bf16.msra.mxu0 0
    %732 = vmatprep.subr.bf16.mxu0 0
    %733 = vmatpush1.bf16.msra.mxu0 0
    %734 = vmatprep.subr.bf16.mxu0 0
    %735 = vmatpush1.bf16.msra.mxu0 0
    %736 = vmatprep.subr.bf16.mxu0 0
    %737 = vmatpush1.bf16.msra.mxu0 0
    %738 = vmatprep.subr.bf16.mxu0 0
    %739 = vmatpush1.bf16.msra.mxu0 0
    %740 = vmatprep.subr.bf16.mxu0 0
    %741 = vmatpush1.bf16.msra.mxu0 0
    %742 = vmatprep.mubr.bf16.mxu0 0
    %743 = vmatmul.mubr.bf16.gmra.mrb[0].mxu0 %v655
    %v744 = vpop.f32.mrb[0].mxu0
    %v745 = vadd.f32 %v660, %v744
    %v746 = vpop.f32.mrb[0].mxu0
    %v747 = vpop.f32.mrb[0].mxu0
    %v748 = vpop.f32.mrb[0].mxu0
    %749 = vdwg.mxu0
    %v750 = vmax.f32 %v745, 0.0
    %s751 = scalar_lea.vmem [#allocation5], 384
    %v752 = vld [vmem:[%s751] sm:$0xf]
    %v753 = vld [vmem:[%s751 + $0x4] sm:$0xf]
    %v754 = vld [vmem:[%s751 + $0x8] sm:$0xf]
    %v755 = vld [vmem:[%s751 + $0xc] sm:$0xf]
    %v756 = vld [vmem:[%s751 + $0x10] sm:$0xf]
    %v757 = vld [vmem:[%s751 + $0x14] sm:$0xf]
    %v758 = vld [vmem:[%s751 + $0x18] sm:$0xf]
    %v759 = vld [vmem:[%s751 + $0x1c] sm:$0xf]
    %v760 = vld [vmem:[%s751 + $0x20] sm:$0xf]
    %v761 = vld [vmem:[%s751 + $0x24] sm:$0xf]
    %v762 = vld [vmem:[%s751 + $0x28] sm:$0xf]
    %v763 = vld [vmem:[%s751 + $0x2c] sm:$0xf]
    %v764 = vld [vmem:[%s751 + $0x30] sm:$0xf]
    %v765 = vld [vmem:[%s751 + $0x34] sm:$0xf]
    %v766 = vld [vmem:[%s751 + $0x38] sm:$0xf]
    %v767 = vld [vmem:[%s751 + $0x3c] sm:$0xf]
    %s768 = scalar_lea.vmem [#allocation7], 6
    %v769 = vld [vmem:[%s768] sm:$0x1]
    %v770 = vpack.c.bf16 %v750, %v750
    %v772 = vlaneseq
    %v773 = vshrl.u32 %v772, 7
    %v774 = vsub.s32 0, %v773
    %v775 = vrot.slane %v769, %v774
    %v793 = vunpack.c.l.b16 %v752
    %v794 = vunpack.c.l.b16 %v753
    %v795 = vunpack.c.l.b16 %v754
    %v796 = vunpack.c.l.b16 %v755
    %v797 = vunpack.c.l.b16 %v756
    %v798 = vunpack.c.l.b16 %v757
    %v799 = vunpack.c.l.b16 %v758
    %v800 = vunpack.c.l.b16 %v759
    %v801 = vunpack.c.l.b16 %v760
    %v802 = vunpack.c.l.b16 %v761
    %v803 = vunpack.c.l.b16 %v762
    %v804 = vunpack.c.l.b16 %v763
    %v805 = vunpack.c.l.b16 %v764
    %v806 = vunpack.c.l.b16 %v765
    %v807 = vunpack.c.l.b16 %v766
    %v808 = vunpack.c.l.b16 %v767
    %v809 = vpack.c.b16 %v794, %v793
    %v810 = vpack.c.b16 %v796, %v795
    %v811 = vpack.c.b16 %v798, %v797
    %v812 = vpack.c.b16 %v800, %v799
    %v813 = vpack.c.b16 %v802, %v801
    %v814 = vpack.c.b16 %v804, %v803
    %v815 = vpack.c.b16 %v806, %v805
    %v816 = vpack.c.b16 %v808, %v807
    %825 = vmatprep.subr.bf16.mxu0 0
    %826 = vmatpush1.bf16.msra.mxu0 %v809
    %827 = vmatprep.subr.bf16.mxu0 0
    %828 = vmatpush1.bf16.msra.mxu0 %v810
    %829 = vmatprep.subr.bf16.mxu0 0
    %830 = vmatpush1.bf16.msra.mxu0 %v811
    %831 = vmatprep.subr.bf16.mxu0 0
    %832 = vmatpush1.bf16.msra.mxu0 %v812
    %833 = vmatprep.subr.bf16.mxu0 0
    %834 = vmatpush1.bf16.msra.mxu0 %v813
    %835 = vmatprep.subr.bf16.mxu0 0
    %836 = vmatpush1.bf16.msra.mxu0 %v814
    %837 = vmatprep.subr.bf16.mxu0 0
    %838 = vmatpush1.bf16.msra.mxu0 %v815
    %839 = vmatprep.subr.bf16.mxu0 0
    %840 = vmatpush1.bf16.msra.mxu0 %v816
    %841 = vmatprep.subr.bf16.mxu0 0
    %842 = vmatpush1.bf16.msra.mxu0 0
    %843 = vmatprep.subr.bf16.mxu0 0
    %844 = vmatpush1.bf16.msra.mxu0 0
    %845 = vmatprep.subr.bf16.mxu0 0
    %846 = vmatpush1.bf16.msra.mxu0 0
    %847 = vmatprep.subr.bf16.mxu0 0
    %848 = vmatpush1.bf16.msra.mxu0 0
    %849 = vmatprep.subr.bf16.mxu0 0
    %850 = vmatpush1.bf16.msra.mxu0 0
    %851 = vmatprep.subr.bf16.mxu0 0
    %852 = vmatpush1.bf16.msra.mxu0 0
    %853 = vmatprep.subr.bf16.mxu0 0
    %854 = vmatpush1.bf16.msra.mxu0 0
    %855 = vmatprep.subr.bf16.mxu0 0
    %856 = vmatpush1.bf16.msra.mxu0 0
    %857 = vmatprep.mubr.bf16.mxu0 0
    %858 = vmatmul.mubr.bf16.gmra.mrb[0].mxu0 %v770
    %v859 = vpop.f32.mrb[0].mxu0
    %v860 = vadd.f32 %v775, %v859
    %v861 = vpop.f32.mrb[0].mxu0
    %v862 = vpop.f32.mrb[0].mxu0
    %v863 = vpop.f32.mrb[0].mxu0
    %864 = vdwg.mxu0
    %v865 = vmax.f32 %v860, 0.0
    %s866 = scalar_lea.vmem [#allocation5], 448
    %v867 = vld [vmem:[%s866] sm:$0xf]
    %v868 = vld [vmem:[%s866 + $0x4] sm:$0xf]
    %v869 = vld [vmem:[%s866 + $0x8] sm:$0xf]
    %v870 = vld [vmem:[%s866 + $0xc] sm:$0xf]
    %v871 = vld [vmem:[%s866 + $0x10] sm:$0xf]
    %v872 = vld [vmem:[%s866 + $0x14] sm:$0xf]
    %v873 = vld [vmem:[%s866 + $0x18] sm:$0xf]
    %v874 = vld [vmem:[%s866 + $0x1c] sm:$0xf]
    %v875 = vld [vmem:[%s866 + $0x20] sm:$0xf]
    %v876 = vld [vmem:[%s866 + $0x24] sm:$0xf]
    %v877 = vld [vmem:[%s866 + $0x28] sm:$0xf]
    %v878 = vld [vmem:[%s866 + $0x2c] sm:$0xf]
    %v879 = vld [vmem:[%s866 + $0x30] sm:$0xf]
    %v880 = vld [vmem:[%s866 + $0x34] sm:$0xf]
    %v881 = vld [vmem:[%s866 + $0x38] sm:$0xf]
    %v882 = vld [vmem:[%s866 + $0x3c] sm:$0xf]
    %s883 = scalar_lea.vmem [#allocation7], 7
    %v884 = vld [vmem:[%s883] sm:$0x1]
    %v885 = vpack.c.bf16 %v865, %v865
    %v887 = vlaneseq
    %v888 = vshrl.u32 %v887, 7
    %v889 = vsub.s32 0, %v888
    %v890 = vrot.slane %v884, %v889
    %v908 = vunpack.c.l.b16 %v867
    %v909 = vunpack.c.l.b16 %v868
    %v910 = vunpack.c.l.b16 %v869
    %v911 = vunpack.c.l.b16 %v870
    %v912 = vunpack.c.l.b16 %v871
    %v913 = vunpack.c.l.b16 %v872
    %v914 = vunpack.c.l.b16 %v873
    %v915 = vunpack.c.l.b16 %v874
    %v916 = vunpack.c.l.b16 %v875
    %v917 = vunpack.c.l.b16 %v876
    %v918 = vunpack.c.l.b16 %v877
    %v919 = vunpack.c.l.b16 %v878
    %v920 = vunpack.c.l.b16 %v879
    %v921 = vunpack.c.l.b16 %v880
    %v922 = vunpack.c.l.b16 %v881
    %v923 = vunpack.c.l.b16 %v882
    %v924 = vpack.c.b16 %v909, %v908
    %v925 = vpack.c.b16 %v911, %v910
    %v926 = vpack.c.b16 %v913, %v912
    %v927 = vpack.c.b16 %v915, %v914
    %v928 = vpack.c.b16 %v917, %v916
    %v929 = vpack.c.b16 %v919, %v918
    %v930 = vpack.c.b16 %v921, %v920
    %v931 = vpack.c.b16 %v923, %v922
    %940 = vmatprep.subr.bf16.mxu0 0
    %941 = vmatpush1.bf16.msra.mxu0 %v924
    %942 = vmatprep.subr.bf16.mxu0 0
    %943 = vmatpush1.bf16.msra.mxu0 %v925
    %944 = vmatprep.subr.bf16.mxu0 0
    %945 = vmatpush1.bf16.msra.mxu0 %v926
    %946 = vmatprep.subr.bf16.mxu0 0
    %947 = vmatpush1.bf16.msra.mxu0 %v927
    %948 = vmatprep.subr.bf16.mxu0 0
    %949 = vmatpush1.bf16.msra.mxu0 %v928
    %950 = vmatprep.subr.bf16.mxu0 0
    %951 = vmatpush1.bf16.msra.mxu0 %v929
    %952 = vmatprep.subr.bf16.mxu0 0
    %953 = vmatpush1.bf16.msra.mxu0 %v930
    %954 = vmatprep.subr.bf16.mxu0 0
    %955 = vmatpush1.bf16.msra.mxu0 %v931
    %956 = vmatprep.subr.bf16.mxu0 0
    %957 = vmatpush1.bf16.msra.mxu0 0
    %958 = vmatprep.subr.bf16.mxu0 0
    %959 = vmatpush1.bf16.msra.mxu0 0
    %960 = vmatprep.subr.bf16.mxu0 0
    %961 = vmatpush1.bf16.msra.mxu0 0
    %962 = vmatprep.subr.bf16.mxu0 0
    %963 = vmatpush1.bf16.msra.mxu0 0
    %964 = vmatprep.subr.bf16.mxu0 0
    %965 = vmatpush1.bf16.msra.mxu0 0
    %966 = vmatprep.subr.bf16.mxu0 0
    %967 = vmatpush1.bf16.msra.mxu0 0
    %968 = vmatprep.subr.bf16.mxu0 0
    %969 = vmatpush1.bf16.msra.mxu0 0
    %970 = vmatprep.subr.bf16.mxu0 0
    %971 = vmatpush1.bf16.msra.mxu0 0
    %972 = vmatprep.mubr.bf16.mxu0 0
    %973 = vmatmul.mubr.bf16.gmra.mrb[0].mxu0 %v885
    %v974 = vpop.f32.mrb[0].mxu0
    %v975 = vadd.f32 %v890, %v974
    %v976 = vpop.f32.mrb[0].mxu0
    %v977 = vpop.f32.mrb[0].mxu0
    %v978 = vpop.f32.mrb[0].mxu0
    %979 = vdwg.mxu0
    %980 = vst [vmem:[#allocation8] sm:$0xff] %v975
    // Predicated region
    $region26: #{tpu_custom_call.1} parent=1 // pred_check
      _
    $region27: #{tpu_custom_call.1} parent=1 // pred_check_branch
      %982 = sbr.rel (0) target = $region29
    $region28: #{tpu_custom_call.1} parent=1 // pred_region
      %s984 = ssub.s32 128, 128
      %985 = vsyncadd [#allocation4], %s984
      %s987 = sshll.u32 [#allocation8], 4
      %s988 = int_to_ptr.vmem [resolvable:$true] %s987
      %990 = dma.vmem_to_hbm [thread:$0]  %s988, 128, %s3, [#allocation4]
    $region29: #{tpu_custom_call.1} parent=1 // pred_fallthru
      _
    // Predicated region
    $region30: #{tpu_custom_call.1} parent=1 // pred_check
      _
    $region31: #{tpu_custom_call.1} parent=1 // pred_check_branch
      %992 = sbr.rel (0) target = $region33
    $region32: #{tpu_custom_call.1} parent=1 // pred_region
      %993 = dma.done [#allocation4], 128
    $region33: #{tpu_custom_call.1} parent=1 // pred_fallthru
      _
    %994 = vsyncpa [#allocation3], 1
    %995 = vsyncpa [#allocation6], 1
    %996 = vsyncpa [#allocation4], 1

</llo_original>
